<compile_context>
chip_gen: v5e
topology: v5e:2x2
jax: 0.10.0
libtpu: 0.0.40
codegen_flags: <defaults>
</compile_context>

<pallas_src>
import functools

import jax
import jax.numpy as jnp
from jax.experimental import pallas as pl
from jax.experimental.pallas import tpu as pltpu

_LANE = 128      # MXU / lane width
_SUBLANE = 16    # bf16 sublane packing (covers f32's 8 as well)


def _round_up(x, m):
    return (x + m - 1) // m * m


def _mlp_kernel(n_layers, *refs):
    """refs = (x_ref, w0, b0, w1, b1, ..., w_{L-1}, b_{L-1}, o_ref).

    bf16 matmuls on the MXU with f32 accumulation; bias-add and tanh in f32,
    activations cast back to bf16 before feeding the next matmul. Every layer
    except the last is followed by tanh (matches the torch.nn.Sequential).
    """
    x_ref = refs[0]
    o_ref = refs[-1]
    param_refs = refs[1:-1]

    h = x_ref[...]                                   # bf16 [tile, in_pad]
    for layer in range(n_layers):
        w_ref = param_refs[2 * layer]                # bf16 [in_pad, out_pad]
        b_ref = param_refs[2 * layer + 1]            # f32  [1, out_pad]
        acc = jnp.dot(h, w_ref[...], preferred_element_type=jnp.float32)
        acc = acc + b_ref[...]
        if layer != n_layers - 1:
            h = jnp.tanh(acc).astype(jnp.bfloat16)
        else:
            o_ref[...] = acc.astype(o_ref.dtype)


def mlp_forward(x, params, *, batch_tile=None, single_buffer_weights=True):
    """Network forward pass with a single pallas_call.

    x:      [B, input_size] float32
    params: list of (W [in, out] f32, b [1, out] f32), ordered input -> hidden* -> output
    Returns [B, output_size] float32.
    """
    B, in_features = x.shape
    n_layers = len(params)
    output_size = params[-1][0].shape[1]

    # ---- Pad feature dims to 128 lanes; cast weights to bf16, keep biases f32. ----
    dims = [in_features] + [w.shape[1] for w, _ in params]
    dims_pad = [_round_up(d, _LANE) for d in dims]

    flat_params = []
    for li, (w, b) in enumerate(params):
        ip, op = dims_pad[li], dims_pad[li + 1]
        w_pad = jnp.zeros((ip, op), jnp.bfloat16)
        w_pad = w_pad.at[: w.shape[0], : w.shape[1]].set(w.astype(jnp.bfloat16))
        b_pad = jnp.zeros((1, op), jnp.float32)
        b_pad = b_pad.at[:, : b.shape[1]].set(b.astype(jnp.float32))
        flat_params += [w_pad, b_pad]

    # ---- Batch tiling: large tile (amortize ~0.35us/step), sublane aligned,
    #      and >=2 grid steps when possible (megacore on v7x). ----
    B_pad = _round_up(B, _SUBLANE)
    if batch_tile is None:
        batch_tile = min(B_pad, 512)
        if B_pad // batch_tile < 2 and B_pad >= 2 * _SUBLANE:
            batch_tile = _round_up(B_pad // 2, _SUBLANE)
    batch_tile = _round_up(batch_tile, _SUBLANE)
    B_grid = _round_up(B_pad, batch_tile)
    n_tiles = B_grid // batch_tile

    x_pad = jnp.zeros((B_grid, dims_pad[0]), jnp.bfloat16)
    x_pad = x_pad.at[:B, :in_features].set(x.astype(jnp.bfloat16))

    # ---- BlockSpecs: x/out tiled over batch; weights loaded whole, single-buffered
    #      (block index never changes so the DMA is elided after step 0). ----
    # TODO(synk): for hidden sizes where the resident weights exceed VMEM, stream
    # them with a K-tiled pltpu.emit_pipeline per layer instead of whole-weight specs.
    in_specs = [pl.BlockSpec((batch_tile, dims_pad[0]), lambda i: (i, 0))]
    weight_kwargs = {}
    if single_buffer_weights:
        weight_kwargs = dict(pipeline_mode=pl.Buffered(buffer_count=1))
    for p in flat_params:
        in_specs.append(pl.BlockSpec(p.shape, lambda i: (0, 0), **weight_kwargs))
    out_spec = pl.BlockSpec((batch_tile, dims_pad[-1]), lambda i: (i, 0))

    # ---- Advisory cost estimate for XLA scheduling. ----
    param_bytes = sum(int(p.size) * p.dtype.itemsize for p in flat_params)
    flops = 2 * B_grid * sum(dims_pad[i] * dims_pad[i + 1] for i in range(n_layers))
    transcendentals = B_grid * sum(dims_pad[i + 1] for i in range(n_layers - 1))
    bytes_accessed = int(x_pad.size * 2 + param_bytes + B_grid * dims_pad[-1] * 4)
    cost = pl.CostEstimate(flops=int(flops),
                           transcendentals=int(transcendentals),
                           bytes_accessed=bytes_accessed)

    # ---- VMEM budget: 2x (pipelined) x/out tiles + weights + working activations. ----
    weight_bufs = 1 if single_buffer_weights else 2
    vmem_est = (2 * batch_tile * dims_pad[0] * 2          # bf16 x tiles (double-buffered)
                + 2 * batch_tile * dims_pad[-1] * 4       # f32 out tiles (double-buffered)
                + weight_bufs * param_bytes               # resident weights/biases
                + 2 * batch_tile * max(dims_pad) * 4)     # in-flight f32 activations
    vmem_limit = int(min(max(2 * vmem_est, 32 * 1024 * 1024), 64 * 1024 * 1024))

    kernel = functools.partial(_mlp_kernel, n_layers)

    y_pad = pl.pallas_call(
        kernel,
        out_shape=jax.ShapeDtypeStruct((B_grid, dims_pad[-1]), jnp.float32),
        grid=(n_tiles,),
        in_specs=in_specs,
        out_specs=out_spec,
        compiler_params=pltpu.CompilerParams(
            dimension_semantics=("parallel",),
            vmem_limit_bytes=vmem_limit,
        ),
        cost_estimate=cost,
    )(x_pad, *flat_params)

    return y_pad[:B, :output_size]


def init_network_params(key, input_size, hidden_size, output_size, depth):
    """Deterministic params matching the Network module's layer shapes.

    Returns list of (W [in, out], b [1, out]) in forward order:
      input layer, `depth` hidden layers, output layer.
    """
    sizes = [(input_size, hidden_size)]
    sizes += [(hidden_size, hidden_size)] * depth
    sizes += [(hidden_size, output_size)]

    params = []
    for (fan_in, fan_out) in sizes:
        key, kw, kb = jax.random.split(key, 3)
        bound = 1.0 / jnp.sqrt(fan_in)  # torch.nn.Linear default init range
        w = jax.random.uniform(kw, (fan_in, fan_out), jnp.float32, -bound, bound)
        b = jax.random.uniform(kb, (1, fan_out), jnp.float32, -bound, bound)
        params.append((w, b))
    return params


def mlp_reference(x, params):
    h = x
    for i, (w, b) in enumerate(params):
        h = h @ w + b
        if i != len(params) - 1:
            h = jnp.tanh(h)
    return h


if __name__ == "__main__":
    input_size, hidden_size, output_size, depth = 16, 32, 8, 2
    batch = 256

    key = jax.random.PRNGKey(0)
    key, kx = jax.random.split(key)
    x = jax.random.normal(kx, (batch, input_size), jnp.float32)

    params = init_network_params(key, input_size, hidden_size, output_size, depth)

    try:
        y = mlp_forward(x, params)
    except Exception:
        # Fallback if pipeline_mode=pl.Buffered(1) is unavailable in this jax
        # version; the only effect is 2x VMEM on the grid-invariant weights.
        y = mlp_forward(x, params, single_buffer_weights=False)
    y = jax.block_until_ready(y)

    y_ref = mlp_reference(x, params)
    assert y.shape == (batch, output_size)
    # bf16 matmuls with f32 accumulation: validate against the f32 reference
    # at a correspondingly looser tolerance.
    assert jnp.allclose(y, y_ref, atol=5e-2, rtol=5e-2), "mismatch vs reference"

    print("KERNEL_OK")
</pallas_src>

<mosaic_0001>
module attributes {stable_mosaic.version = 11 : i64} {
  func.func @_mlp_kernel(%arg0: i32, %arg1: memref<128x128xbf16, #tpu.memory_space<vmem>>, %arg2: memref<128x128xbf16, #tpu.memory_space<vmem>>, %arg3: memref<1x128xf32, #tpu.memory_space<vmem>>, %arg4: memref<128x128xbf16, #tpu.memory_space<vmem>>, %arg5: memref<1x128xf32, #tpu.memory_space<vmem>>, %arg6: memref<128x128xbf16, #tpu.memory_space<vmem>>, %arg7: memref<1x128xf32, #tpu.memory_space<vmem>>, %arg8: memref<128x128xbf16, #tpu.memory_space<vmem>>, %arg9: memref<1x128xf32, #tpu.memory_space<vmem>>, %arg10: memref<128x128xf32, #tpu.memory_space<vmem>>) attributes {dimension_semantics = [#tpu.dimension_semantics<parallel>], iteration_bounds = array<i64: 2>, scalar_prefetch = 0 : i64, scratch_operands = 0 : i64, tpu.core_type = #tpu.core_type<tc>, window_params = [{transform_indices = @transform_0, window_bounds = array<i64: 128, 128>}, {pipeline_mode = #tpu.pipeline_mode<synchronous>, transform_indices = @transform_1, window_bounds = array<i64: 128, 128>}, {pipeline_mode = #tpu.pipeline_mode<synchronous>, transform_indices = @transform_2, window_bounds = array<i64: 1, 128>}, {pipeline_mode = #tpu.pipeline_mode<synchronous>, transform_indices = @transform_3, window_bounds = array<i64: 128, 128>}, {pipeline_mode = #tpu.pipeline_mode<synchronous>, transform_indices = @transform_4, window_bounds = array<i64: 1, 128>}, {pipeline_mode = #tpu.pipeline_mode<synchronous>, transform_indices = @transform_5, window_bounds = array<i64: 128, 128>}, {pipeline_mode = #tpu.pipeline_mode<synchronous>, transform_indices = @transform_6, window_bounds = array<i64: 1, 128>}, {pipeline_mode = #tpu.pipeline_mode<synchronous>, transform_indices = @transform_7, window_bounds = array<i64: 128, 128>}, {pipeline_mode = #tpu.pipeline_mode<synchronous>, transform_indices = @transform_8, window_bounds = array<i64: 1, 128>}, {transform_indices = @transform_9, window_bounds = array<i64: 128, 128>}]} {
    %c0 = arith.constant 0 : index
    %c0_0 = arith.constant 0 : index
    %0 = vector.load %arg1[%c0, %c0_0] : memref<128x128xbf16, #tpu.memory_space<vmem>>, vector<128x128xbf16>
    %c0_1 = arith.constant 0 : index
    %c0_2 = arith.constant 0 : index
    %1 = vector.load %arg2[%c0_1, %c0_2] : memref<128x128xbf16, #tpu.memory_space<vmem>>, vector<128x128xbf16>
    %cst = arith.constant dense<0.000000e+00> : vector<128x128xf32>
    %2 = tpu.matmul %0, %1, %cst {dimension_numbers = #tpu.dot_dimension_numbers<[1], [0], [0], [1], [0, 0, 1, 1], [], []>} : vector<128x128xbf16>, vector<128x128xbf16>, vector<128x128xf32> -> vector<128x128xf32>
    %c0_3 = arith.constant 0 : index
    %c0_4 = arith.constant 0 : index
    %3 = vector.load %arg3[%c0_3, %c0_4] : memref<1x128xf32, #tpu.memory_space<vmem>>, vector<1x128xf32>
    %4 = vector.broadcast %3 : vector<1x128xf32> to vector<128x128xf32>
    %5 = arith.addf %2, %4 : vector<128x128xf32>
    %6 = math.tanh %5 : vector<128x128xf32>
    %7 = arith.truncf %6 : vector<128x128xf32> to vector<128x128xbf16>
    %c0_5 = arith.constant 0 : index
    %c0_6 = arith.constant 0 : index
    %8 = vector.load %arg4[%c0_5, %c0_6] : memref<128x128xbf16, #tpu.memory_space<vmem>>, vector<128x128xbf16>
    %cst_7 = arith.constant dense<0.000000e+00> : vector<128x128xf32>
    %9 = tpu.matmul %7, %8, %cst_7 {dimension_numbers = #tpu.dot_dimension_numbers<[1], [0], [0], [1], [0, 0, 1, 1], [], []>} : vector<128x128xbf16>, vector<128x128xbf16>, vector<128x128xf32> -> vector<128x128xf32>
    %c0_8 = arith.constant 0 : index
    %c0_9 = arith.constant 0 : index
    %10 = vector.load %arg5[%c0_8, %c0_9] : memref<1x128xf32, #tpu.memory_space<vmem>>, vector<1x128xf32>
    %11 = vector.broadcast %10 : vector<1x128xf32> to vector<128x128xf32>
    %12 = arith.addf %9, %11 : vector<128x128xf32>
    %13 = math.tanh %12 : vector<128x128xf32>
    %14 = arith.truncf %13 : vector<128x128xf32> to vector<128x128xbf16>
    %c0_10 = arith.constant 0 : index
    %c0_11 = arith.constant 0 : index
    %15 = vector.load %arg6[%c0_10, %c0_11] : memref<128x128xbf16, #tpu.memory_space<vmem>>, vector<128x128xbf16>
    %cst_12 = arith.constant dense<0.000000e+00> : vector<128x128xf32>
    %16 = tpu.matmul %14, %15, %cst_12 {dimension_numbers = #tpu.dot_dimension_numbers<[1], [0], [0], [1], [0, 0, 1, 1], [], []>} : vector<128x128xbf16>, vector<128x128xbf16>, vector<128x128xf32> -> vector<128x128xf32>
    %c0_13 = arith.constant 0 : index
    %c0_14 = arith.constant 0 : index
    %17 = vector.load %arg7[%c0_13, %c0_14] : memref<1x128xf32, #tpu.memory_space<vmem>>, vector<1x128xf32>
    %18 = vector.broadcast %17 : vector<1x128xf32> to vector<128x128xf32>
    %19 = arith.addf %16, %18 : vector<128x128xf32>
    %20 = math.tanh %19 : vector<128x128xf32>
    %21 = arith.truncf %20 : vector<128x128xf32> to vector<128x128xbf16>
    %c0_15 = arith.constant 0 : index
    %c0_16 = arith.constant 0 : index
    %22 = vector.load %arg8[%c0_15, %c0_16] : memref<128x128xbf16, #tpu.memory_space<vmem>>, vector<128x128xbf16>
    %cst_17 = arith.constant dense<0.000000e+00> : vector<128x128xf32>
    %23 = tpu.matmul %21, %22, %cst_17 {dimension_numbers = #tpu.dot_dimension_numbers<[1], [0], [0], [1], [0, 0, 1, 1], [], []>} : vector<128x128xbf16>, vector<128x128xbf16>, vector<128x128xf32> -> vector<128x128xf32>
    %c0_18 = arith.constant 0 : index
    %c0_19 = arith.constant 0 : index
    %24 = vector.load %arg9[%c0_18, %c0_19] : memref<1x128xf32, #tpu.memory_space<vmem>>, vector<1x128xf32>
    %25 = vector.broadcast %24 : vector<1x128xf32> to vector<128x128xf32>
    %26 = arith.addf %23, %25 : vector<128x128xf32>
    %c0_20 = arith.constant 0 : index
    %c0_21 = arith.constant 0 : index
    %27 = vector.load %arg10[%c0_20, %c0_21] : memref<128x128xf32, #tpu.memory_space<vmem>>, vector<128x128xf32>
    tpu.vector_store %arg10[%c0_20, %c0_21], %26 {strides = array<i32>} : memref<128x128xf32, #tpu.memory_space<vmem>>, vector<128x128xf32>,
    return
  }
  func.func @transform_0(%arg0: i32) -> (i32, i32) {
    %c0_i32 = arith.constant 0 : i32
    %c0_i32_0 = arith.constant 0 : i32
    return %arg0, %c0_i32 : i32, i32
  }
  func.func @transform_1(%arg0: i32) -> (i32, i32) {
    %c0_i32 = arith.constant 0 : i32
    %c0_i32_0 = arith.constant 0 : i32
    %c0_i32_1 = arith.constant 0 : i32
    return %c0_i32, %c0_i32_0 : i32, i32
  }
  func.func @transform_2(%arg0: i32) -> (i32, i32) {
    %c0_i32 = arith.constant 0 : i32
    %c0_i32_0 = arith.constant 0 : i32
    %c0_i32_1 = arith.constant 0 : i32
    return %c0_i32, %c0_i32_0 : i32, i32
  }
  func.func @transform_3(%arg0: i32) -> (i32, i32) {
    %c0_i32 = arith.constant 0 : i32
    %c0_i32_0 = arith.constant 0 : i32
    %c0_i32_1 = arith.constant 0 : i32
    return %c0_i32, %c0_i32_0 : i32, i32
  }
  func.func @transform_4(%arg0: i32) -> (i32, i32) {
    %c0_i32 = arith.constant 0 : i32
    %c0_i32_0 = arith.constant 0 : i32
    %c0_i32_1 = arith.constant 0 : i32
    return %c0_i32, %c0_i32_0 : i32, i32
  }
  func.func @transform_5(%arg0: i32) -> (i32, i32) {
    %c0_i32 = arith.constant 0 : i32
    %c0_i32_0 = arith.constant 0 : i32
    %c0_i32_1 = arith.constant 0 : i32
    return %c0_i32, %c0_i32_0 : i32, i32
  }
  func.func @transform_6(%arg0: i32) -> (i32, i32) {
    %c0_i32 = arith.constant 0 : i32
    %c0_i32_0 = arith.constant 0 : i32
    %c0_i32_1 = arith.constant 0 : i32
    return %c0_i32, %c0_i32_0 : i32, i32
  }
  func.func @transform_7(%arg0: i32) -> (i32, i32) {
    %c0_i32 = arith.constant 0 : i32
    %c0_i32_0 = arith.constant 0 : i32
    %c0_i32_1 = arith.constant 0 : i32
    return %c0_i32, %c0_i32_0 : i32, i32
  }
  func.func @transform_8(%arg0: i32) -> (i32, i32) {
    %c0_i32 = arith.constant 0 : i32
    %c0_i32_0 = arith.constant 0 : i32
    %c0_i32_1 = arith.constant 0 : i32
    return %c0_i32, %c0_i32_0 : i32, i32
  }
  func.func @transform_9(%arg0: i32) -> (i32, i32) {
    %c0_i32 = arith.constant 0 : i32
    %c0_i32_0 = arith.constant 0 : i32
    return %arg0, %c0_i32 : i32, i32
  }
}

module attributes {stable_mosaic.version = 11 : i64} {
  func.func @_mlp_kernel(%arg0: i32, %arg1: memref<128x128xbf16, #tpu.memory_space<vmem>>, %arg2: memref<128x128xbf16, #tpu.memory_space<vmem>>, %arg3: memref<1x128xf32, #tpu.memory_space<vmem>>, %arg4: memref<128x128xbf16, #tpu.memory_space<vmem>>, %arg5: memref<1x128xf32, #tpu.memory_space<vmem>>, %arg6: memref<128x128xbf16, #tpu.memory_space<vmem>>, %arg7: memref<1x128xf32, #tpu.memory_space<vmem>>, %arg8: memref<128x128xbf16, #tpu.memory_space<vmem>>, %arg9: memref<1x128xf32, #tpu.memory_space<vmem>>, %arg10: memref<128x128xf32, #tpu.memory_space<vmem>>) attributes {dimension_semantics = [#tpu.dimension_semantics<parallel>], iteration_bounds = array<i64: 2>, scalar_prefetch = 0 : i64, scratch_operands = 0 : i64, tpu.core_type = #tpu.core_type<tc>, window_params = [{transform_indices = @transform_0, window_bounds = array<i64: 128, 128>}, {pipeline_mode = #tpu.pipeline_mode<synchronous>, transform_indices = @transform_1, window_bounds = array<i64: 128, 128>}, {pipeline_mode = #tpu.pipeline_mode<synchronous>, transform_indices = @transform_2, window_bounds = array<i64: 1, 128>}, {pipeline_mode = #tpu.pipeline_mode<synchronous>, transform_indices = @transform_3, window_bounds = array<i64: 128, 128>}, {pipeline_mode = #tpu.pipeline_mode<synchronous>, transform_indices = @transform_4, window_bounds = array<i64: 1, 128>}, {pipeline_mode = #tpu.pipeline_mode<synchronous>, transform_indices = @transform_5, window_bounds = array<i64: 128, 128>}, {pipeline_mode = #tpu.pipeline_mode<synchronous>, transform_indices = @transform_6, window_bounds = array<i64: 1, 128>}, {pipeline_mode = #tpu.pipeline_mode<synchronous>, transform_indices = @transform_7, window_bounds = array<i64: 128, 128>}, {pipeline_mode = #tpu.pipeline_mode<synchronous>, transform_indices = @transform_8, window_bounds = array<i64: 1, 128>}, {transform_indices = @transform_9, window_bounds = array<i64: 128, 128>}]} {
    %c0 = arith.constant 0 : index
    %c0_0 = arith.constant 0 : index
    %0 = vector.load %arg1[%c0, %c0_0] : memref<128x128xbf16, #tpu.memory_space<vmem>>, vector<128x128xbf16>
    %c0_1 = arith.constant 0 : index
    %c0_2 = arith.constant 0 : index
    %1 = vector.load %arg2[%c0_1, %c0_2] : memref<128x128xbf16, #tpu.memory_space<vmem>>, vector<128x128xbf16>
    %cst = arith.constant dense<0.000000e+00> : vector<128x128xf32>
    %2 = tpu.matmul %0, %1, %cst {dimension_numbers = #tpu.dot_dimension_numbers<[1], [0], [0], [1], [0, 0, 1, 1], [], []>} : vector<128x128xbf16>, vector<128x128xbf16>, vector<128x128xf32> -> vector<128x128xf32>
    %c0_3 = arith.constant 0 : index
    %c0_4 = arith.constant 0 : index
    %3 = vector.load %arg3[%c0_3, %c0_4] : memref<1x128xf32, #tpu.memory_space<vmem>>, vector<1x128xf32>
    %4 = vector.broadcast %3 : vector<1x128xf32> to vector<128x128xf32>
    %5 = arith.addf %2, %4 : vector<128x128xf32>
    %6 = math.tanh %5 : vector<128x128xf32>
    %7 = arith.truncf %6 : vector<128x128xf32> to vector<128x128xbf16>
    %c0_5 = arith.constant 0 : index
    %c0_6 = arith.constant 0 : index
    %8 = vector.load %arg4[%c0_5, %c0_6] : memref<128x128xbf16, #tpu.memory_space<vmem>>, vector<128x128xbf16>
    %cst_7 = arith.constant dense<0.000000e+00> : vector<128x128xf32>
    %9 = tpu.matmul %7, %8, %cst_7 {dimension_numbers = #tpu.dot_dimension_numbers<[1], [0], [0], [1], [0, 0, 1, 1], [], []>} : vector<128x128xbf16>, vector<128x128xbf16>, vector<128x128xf32> -> vector<128x128xf32>
    %c0_8 = arith.constant 0 : index
    %c0_9 = arith.constant 0 : index
    %10 = vector.load %arg5[%c0_8, %c0_9] : memref<1x128xf32, #tpu.memory_space<vmem>>, vector<1x128xf32>
    %11 = vector.broadcast %10 : vector<1x128xf32> to vector<128x128xf32>
    %12 = arith.addf %9, %11 : vector<128x128xf32>
    %13 = math.tanh %12 : vector<128x128xf32>
    %14 = arith.truncf %13 : vector<128x128xf32> to vector<128x128xbf16>
    %c0_10 = arith.constant 0 : index
    %c0_11 = arith.constant 0 : index
    %15 = vector.load %arg6[%c0_10, %c0_11] : memref<128x128xbf16, #tpu.memory_space<vmem>>, vector<128x128xbf16>
    %cst_12 = arith.constant dense<0.000000e+00> : vector<128x128xf32>
    %16 = tpu.matmul %14, %15, %cst_12 {dimension_numbers = #tpu.dot_dimension_numbers<[1], [0], [0], [1], [0, 0, 1, 1], [], []>} : vector<128x128xbf16>, vector<128x128xbf16>, vector<128x128xf32> -> vector<128x128xf32>
    %c0_13 = arith.constant 0 : index
    %c0_14 = arith.constant 0 : index
    %17 = vector.load %arg7[%c0_13, %c0_14] : memref<1x128xf32, #tpu.memory_space<vmem>>, vector<1x128xf32>
    %18 = vector.broadcast %17 : vector<1x128xf32> to vector<128x128xf32>
    %19 = arith.addf %16, %18 : vector<128x128xf32>
    %20 = math.tanh %19 : vector<128x128xf32>
    %21 = arith.truncf %20 : vector<128x128xf32> to vector<128x128xbf16>
    %c0_15 = arith.constant 0 : index
    %c0_16 = arith.constant 0 : index
    %22 = vector.load %arg8[%c0_15, %c0_16] : memref<128x128xbf16, #tpu.memory_space<vmem>>, vector<128x128xbf16>
    %cst_17 = arith.constant dense<0.000000e+00> : vector<128x128xf32>
    %23 = tpu.matmul %21, %22, %cst_17 {dimension_numbers = #tpu.dot_dimension_numbers<[1], [0], [0], [1], [0, 0, 1, 1], [], []>} : vector<128x128xbf16>, vector<128x128xbf16>, vector<128x128xf32> -> vector<128x128xf32>
    %c0_18 = arith.constant 0 : index
    %c0_19 = arith.constant 0 : index
    %24 = vector.load %arg9[%c0_18, %c0_19] : memref<1x128xf32, #tpu.memory_space<vmem>>, vector<1x128xf32>
    %25 = vector.broadcast %24 : vector<1x128xf32> to vector<128x128xf32>
    %26 = arith.addf %23, %25 : vector<128x128xf32>
    %c0_20 = arith.constant 0 : index
    %c0_21 = arith.constant 0 : index
    %27 = vector.load %arg10[%c0_20, %c0_21] : memref<128x128xf32, #tpu.memory_space<vmem>>, vector<128x128xf32>
    tpu.vector_store %arg10[%c0_20, %c0_21], %26 {strides = array<i32>} : memref<128x128xf32, #tpu.memory_space<vmem>>, vector<128x128xf32>,
    return
  }
  func.func @transform_0(%arg0: i32) -> (i32, i32) {
    %c0_i32 = arith.constant 0 : i32
    %c0_i32_0 = arith.constant 0 : i32
    return %arg0, %c0_i32 : i32, i32
  }
  func.func @transform_1(%arg0: i32) -> (i32, i32) {
    %c0_i32 = arith.constant 0 : i32
    %c0_i32_0 = arith.constant 0 : i32
    %c0_i32_1 = arith.constant 0 : i32
    return %c0_i32, %c0_i32_0 : i32, i32
  }
  func.func @transform_2(%arg0: i32) -> (i32, i32) {
    %c0_i32 = arith.constant 0 : i32
    %c0_i32_0 = arith.constant 0 : i32
    %c0_i32_1 = arith.constant 0 : i32
    return %c0_i32, %c0_i32_0 : i32, i32
  }
  func.func @transform_3(%arg0: i32) -> (i32, i32) {
    %c0_i32 = arith.constant 0 : i32
    %c0_i32_0 = arith.constant 0 : i32
    %c0_i32_1 = arith.constant 0 : i32
    return %c0_i32, %c0_i32_0 : i32, i32
  }
  func.func @transform_4(%arg0: i32) -> (i32, i32) {
    %c0_i32 = arith.constant 0 : i32
    %c0_i32_0 = arith.constant 0 : i32
    %c0_i32_1 = arith.constant 0 : i32
    return %c0_i32, %c0_i32_0 : i32, i32
  }
  func.func @transform_5(%arg0: i32) -> (i32, i32) {
    %c0_i32 = arith.constant 0 : i32
    %c0_i32_0 = arith.constant 0 : i32
    %c0_i32_1 = arith.constant 0 : i32
    return %c0_i32, %c0_i32_0 : i32, i32
  }
  func.func @transform_6(%arg0: i32) -> (i32, i32) {
    %c0_i32 = arith.constant 0 : i32
    %c0_i32_0 = arith.constant 0 : i32
    %c0_i32_1 = arith.constant 0 : i32
    return %c0_i32, %c0_i32_0 : i32, i32
  }
  func.func @transform_7(%arg0: i32) -> (i32, i32) {
    %c0_i32 = arith.constant 0 : i32
    %c0_i32_0 = arith.constant 0 : i32
    %c0_i32_1 = arith.constant 0 : i32
    return %c0_i32, %c0_i32_0 : i32, i32
  }
  func.func @transform_8(%arg0: i32) -> (i32, i32) {
    %c0_i32 = arith.constant 0 : i32
    %c0_i32_0 = arith.constant 0 : i32
    %c0_i32_1 = arith.constant 0 : i32
    return %c0_i32, %c0_i32_0 : i32, i32
  }
  func.func @transform_9(%arg0: i32) -> (i32, i32) {
    %c0_i32 = arith.constant 0 : i32
    %c0_i32_0 = arith.constant 0 : i32
    return %arg0, %c0_i32 : i32, i32
  }
}

</mosaic_0001>

<llo_original>
// kernel: tpu_custom_call.1
$region0: #{tpu_custom_call.1}
  #allocation0 [shape = 'u32[]', space=smem, size = 0x4, offset = 0x4, fixed_abs, tag = 'smem constant byte address 0x4 - core index']
  #allocation1 [shape = 'u32[72,128]{1,0:T(1,128)}', space=vmem, size = 0x9000, scoped, tag = 'internal scratch']
  %s0 = inlined_call_operand.hbm [shape: bf16[256,128], index: 0, kind: input, shape index: {}]
  %s1 = inlined_call_operand.hbm [shape: bf16[128,128], index: 1, kind: input, shape index: {}]
  %s2 = inlined_call_operand.vmem [shape: f32[1,128], index: 2, kind: input, shape index: {}]
  %s3 = inlined_call_operand.hbm [shape: bf16[128,128], index: 3, kind: input, shape index: {}]
  %s4 = inlined_call_operand.vmem [shape: f32[1,128], index: 4, kind: input, shape index: {}]
  %s5 = inlined_call_operand.hbm [shape: bf16[128,128], index: 5, kind: input, shape index: {}]
  %s6 = inlined_call_operand.vmem [shape: f32[1,128], index: 6, kind: input, shape index: {}]
  %s7 = inlined_call_operand.hbm [shape: bf16[128,128], index: 7, kind: input, shape index: {}]
  %s8 = inlined_call_operand.vmem [shape: f32[1,128], index: 8, kind: input, shape index: {}]
  %s9 = inlined_call_operand.hbm [shape: f32[256,128], index: 9, kind: output, shape index: {}]
  %s10 = sld [smem:[#allocation0]]
  $region89: #{tpu_custom_call.1} parent=0
    _
  %s12 = ssub.s32 1, %s10
  %s13 = scalar_select 0, %s12, %s10
  $region1: #{tpu_custom_call.1} parent=0
    #allocation2 [shape = 'u8[65536]{0}', space=vmem, size = 0x10000, scoped, tag = 'input window, operand 0']
    #allocation3 [shape = 's32[2]{0}', space=sflag, size = 0x8, scoped, tag = 'scoped memory for tpu_custom_call.1']
    #allocation4 [shape = 's32[2]{0}', space=sflag, size = 0x8, scoped, tag = 'scoped memory for tpu_custom_call.1']
    #allocation5 [shape = 'u8[32768]{0}', space=vmem, size = 0x8000, scoped, tag = 'input window, operand 1, single buffered']
    #allocation6 [shape = 's32[1]{0}', space=sflag, size = 0x4, scoped, tag = 'scoped memory for tpu_custom_call.1']
    #allocation7 [shape = 'u8[32768]{0}', space=vmem, size = 0x8000, scoped, tag = 'input window, operand 3, single buffered']
    #allocation8 [shape = 'u8[32768]{0}', space=vmem, size = 0x8000, scoped, tag = 'input window, operand 5, single buffered']
    #allocation9 [shape = 's32[1]{0}', space=sflag, size = 0x4, scoped, tag = 'scoped memory for tpu_custom_call.1']
    #allocation10 [shape = 'u8[32768]{0}', space=vmem, size = 0x8000, scoped, tag = 'input window, operand 7, single buffered']
    #allocation11 [shape = 'u8[131072]{0}', space=vmem, size = 0x20000, scoped, tag = 'output window, operand 0']
    %14 = vsyncpa [#allocation3], 0
    %s15 = scalar_lea.sflag [#allocation3], 1
    %16 = vsyncpa %s15, 0
    %17 = vsyncpa [#allocation6], 0
    %18 = vsyncpa [#allocation9], 0
    %19 = vsyncpa [#allocation4], 0
    %s20 = scalar_lea.sflag [#allocation4], 1
    %21 = vsyncpa %s20, 0
    loop: start=0, step=1, limit=4
    $region2: #{tpu_custom_call.1} parent=1 // loop_pre_header
      _
    $region3: #{tpu_custom_call.1} parent=1 // loop_header
      %s23 = sphi 0, %s27
      %p24 = scmp.ge.s32.totalorder %s23, 4
      %s33 = sphi 0, %s35
      %s36 = sphi 0, %s33
      %s37 = sphi 0, %s36
      %s53 = sphi 0, %s37
      %s57 = sphi 0, %s57
      %s59 = sphi 0, %s57
      %s60 = sphi 0, %s59
      %s74 = sphi 0, %s60
      %s78 = sphi 0, %s78
      %s80 = sphi 0, %s78
      %s81 = sphi 0, %s80
      %s95 = sphi 0, %s81
      %s99 = sphi 0, %s99
      %s101 = sphi 0, %s99
      %s102 = sphi 0, %s101
      %s116 = sphi 0, %s102
      %s120 = sphi 0, %s120
      %s122 = sphi 0, %s120
      %s123 = sphi 0, %s122
      %s137 = sphi 0, %s123
      %s141 = sphi 0, %s141
      %s143 = sphi 0, %s141
      %s144 = sphi 0, %s143
      %s158 = sphi 0, %s144
      %s162 = sphi 0, %s162
      %s164 = sphi 0, %s162
      %s165 = sphi 0, %s164
      %s179 = sphi 0, %s165
      %s183 = sphi 0, %s183
      %s185 = sphi 0, %s183
      %s186 = sphi 0, %s185
      %s200 = sphi 0, %s186
      %s204 = sphi 0, %s204
      %s206 = sphi 0, %s204
      %s207 = sphi 0, %s206
      %s221 = sphi 0, %s207
      %s227 = sphi 0, %s229
      %s230 = sphi 0, %s227
      %s231 = sphi 0, %s230
      %s247 = sphi 0, %s231
    $region4: #{tpu_custom_call.1} parent=1 // loop_header_branch
      %26 = sbr.rel (%p24) target = $region8
    $region5: #{tpu_custom_call.1} parent=1 // loop_body
      %s28 = ssub.s32 %s23, 1
      %s29 = ssub.s32 %s23, 2
      %s30 = sadd.s32 %s23, 1
      %s31 = ssub.s32 %s23, %s30
      %p32 = scmp.eq.s32.totalorder %s31, 0
      %s34 = sadd.s32 %s33, 1
      %s35 = scalar_select %p32, %s33, %s34
      %p38 = pneg %p32
      %p39 = scmp.eq.s32.totalorder %s23, 1
      %p40 = por %p38, %p39
      %p41 = scmp.ne.s32.totalorder %s33, %s36
      %p42 = scmp.eq.s32.totalorder %s23, 0
      %p43 = por %p41, %p42
      %p44 = scmp.ne.s32.totalorder %s33, %s36
      %p45 = scmp.eq.s32.totalorder %s28, 1
      %p46 = por %p44, %p45
      %p47 = scmp.ne.s32.totalorder %s36, %s37
      %p48 = scmp.eq.s32.totalorder %s28, 0
      %p49 = por %p47, %p48
      %p50 = scmp.ne.s32.totalorder %s36, %s37
      %p51 = scmp.eq.s32.totalorder %s29, 1
      %p52 = por %p50, %p51
      %p54 = scmp.ne.s32.totalorder %s37, %s53
      %p55 = scmp.eq.s32.totalorder %s29, 0
      %p56 = por %p54, %p55
      %s58 = sadd.s32 %s57, 1
      %p61 = scmp.eq.s32.totalorder %s23, 1
      %p62 = scmp.ne.s32.totalorder %s57, %s59
      %p63 = scmp.eq.s32.totalorder %s23, 0
      %p64 = por %p62, %p63
      %p65 = scmp.ne.s32.totalorder %s57, %s59
      %p66 = scmp.eq.s32.totalorder %s28, 1
      %p67 = por %p65, %p66
      %p68 = scmp.ne.s32.totalorder %s59, %s60
      %p69 = scmp.eq.s32.totalorder %s28, 0
      %p70 = por %p68, %p69
      %p71 = scmp.ne.s32.totalorder %s59, %s60
      %p72 = scmp.eq.s32.totalorder %s29, 1
      %p73 = por %p71, %p72
      %p75 = scmp.ne.s32.totalorder %s60, %s74
      %p76 = scmp.eq.s32.totalorder %s29, 0
      %p77 = por %p75, %p76
      %s79 = sadd.s32 %s78, 1
      %p82 = scmp.eq.s32.totalorder %s23, 1
      %p83 = scmp.ne.s32.totalorder %s78, %s80
      %p84 = scmp.eq.s32.totalorder %s23, 0
      %p85 = por %p83, %p84
      %p86 = scmp.ne.s32.totalorder %s78, %s80
      %p87 = scmp.eq.s32.totalorder %s28, 1
      %p88 = por %p86, %p87
      %p89 = scmp.ne.s32.totalorder %s80, %s81
      %p90 = scmp.eq.s32.totalorder %s28, 0
      %p91 = por %p89, %p90
      %p92 = scmp.ne.s32.totalorder %s80, %s81
      %p93 = scmp.eq.s32.totalorder %s29, 1
      %p94 = por %p92, %p93
      %p96 = scmp.ne.s32.totalorder %s81, %s95
      %p97 = scmp.eq.s32.totalorder %s29, 0
      %p98 = por %p96, %p97
      %s100 = sadd.s32 %s99, 1
      %p103 = scmp.eq.s32.totalorder %s23, 1
      %p104 = scmp.ne.s32.totalorder %s99, %s101
      %p105 = scmp.eq.s32.totalorder %s23, 0
      %p106 = por %p104, %p105
      %p107 = scmp.ne.s32.totalorder %s99, %s101
      %p108 = scmp.eq.s32.totalorder %s28, 1
      %p109 = por %p107, %p108
      %p110 = scmp.ne.s32.totalorder %s101, %s102
      %p111 = scmp.eq.s32.totalorder %s28, 0
      %p112 = por %p110, %p111
      %p113 = scmp.ne.s32.totalorder %s101, %s102
      %p114 = scmp.eq.s32.totalorder %s29, 1
      %p115 = por %p113, %p114
      %p117 = scmp.ne.s32.totalorder %s102, %s116
      %p118 = scmp.eq.s32.totalorder %s29, 0
      %p119 = por %p117, %p118
      %s121 = sadd.s32 %s120, 1
      %p124 = scmp.eq.s32.totalorder %s23, 1
      %p125 = scmp.ne.s32.totalorder %s120, %s122
      %p126 = scmp.eq.s32.totalorder %s23, 0
      %p127 = por %p125, %p126
      %p128 = scmp.ne.s32.totalorder %s120, %s122
      %p129 = scmp.eq.s32.totalorder %s28, 1
      %p130 = por %p128, %p129
      %p131 = scmp.ne.s32.totalorder %s122, %s123
      %p132 = scmp.eq.s32.totalorder %s28, 0
      %p133 = por %p131, %p132
      %p134 = scmp.ne.s32.totalorder %s122, %s123
      %p135 = scmp.eq.s32.totalorder %s29, 1
      %p136 = por %p134, %p135
      %p138 = scmp.ne.s32.totalorder %s123, %s137
      %p139 = scmp.eq.s32.totalorder %s29, 0
      %p140 = por %p138, %p139
      %s142 = sadd.s32 %s141, 1
      %p145 = scmp.eq.s32.totalorder %s23, 1
      %p146 = scmp.ne.s32.totalorder %s141, %s143
      %p147 = scmp.eq.s32.totalorder %s23, 0
      %p148 = por %p146, %p147
      %p149 = scmp.ne.s32.totalorder %s141, %s143
      %p150 = scmp.eq.s32.totalorder %s28, 1
      %p151 = por %p149, %p150
      %p152 = scmp.ne.s32.totalorder %s143, %s144
      %p153 = scmp.eq.s32.totalorder %s28, 0
      %p154 = por %p152, %p153
      %p155 = scmp.ne.s32.totalorder %s143, %s144
      %p156 = scmp.eq.s32.totalorder %s29, 1
      %p157 = por %p155, %p156
      %p159 = scmp.ne.s32.totalorder %s144, %s158
      %p160 = scmp.eq.s32.totalorder %s29, 0
      %p161 = por %p159, %p160
      %s163 = sadd.s32 %s162, 1
      %p166 = scmp.eq.s32.totalorder %s23, 1
      %p167 = scmp.ne.s32.totalorder %s162, %s164
      %p168 = scmp.eq.s32.totalorder %s23, 0
      %p169 = por %p167, %p168
      %p170 = scmp.ne.s32.totalorder %s162, %s164
      %p171 = scmp.eq.s32.totalorder %s28, 1
      %p172 = por %p170, %p171
      %p173 = scmp.ne.s32.totalorder %s164, %s165
      %p174 = scmp.eq.s32.totalorder %s28, 0
      %p175 = por %p173, %p174
      %p176 = scmp.ne.s32.totalorder %s164, %s165
      %p177 = scmp.eq.s32.totalorder %s29, 1
      %p178 = por %p176, %p177
      %p180 = scmp.ne.s32.totalorder %s165, %s179
      %p181 = scmp.eq.s32.totalorder %s29, 0
      %p182 = por %p180, %p181
      %s184 = sadd.s32 %s183, 1
      %p187 = scmp.eq.s32.totalorder %s23, 1
      %p188 = scmp.ne.s32.totalorder %s183, %s185
      %p189 = scmp.eq.s32.totalorder %s23, 0
      %p190 = por %p188, %p189
      %p191 = scmp.ne.s32.totalorder %s183, %s185
      %p192 = scmp.eq.s32.totalorder %s28, 1
      %p193 = por %p191, %p192
      %p194 = scmp.ne.s32.totalorder %s185, %s186
      %p195 = scmp.eq.s32.totalorder %s28, 0
      %p196 = por %p194, %p195
      %p197 = scmp.ne.s32.totalorder %s185, %s186
      %p198 = scmp.eq.s32.totalorder %s29, 1
      %p199 = por %p197, %p198
      %p201 = scmp.ne.s32.totalorder %s186, %s200
      %p202 = scmp.eq.s32.totalorder %s29, 0
      %p203 = por %p201, %p202
      %s205 = sadd.s32 %s204, 1
      %p208 = scmp.eq.s32.totalorder %s23, 1
      %p209 = scmp.ne.s32.totalorder %s204, %s206
      %p210 = scmp.eq.s32.totalorder %s23, 0
      %p211 = por %p209, %p210
      %p212 = scmp.ne.s32.totalorder %s204, %s206
      %p213 = scmp.eq.s32.totalorder %s28, 1
      %p214 = por %p212, %p213
      %p215 = scmp.ne.s32.totalorder %s206, %s207
      %p216 = scmp.eq.s32.totalorder %s28, 0
      %p217 = por %p215, %p216
      %p218 = scmp.ne.s32.totalorder %s206, %s207
      %p219 = scmp.eq.s32.totalorder %s29, 1
      %p220 = por %p218, %p219
      %p222 = scmp.ne.s32.totalorder %s207, %s221
      %p223 = scmp.eq.s32.totalorder %s29, 0
      %p224 = por %p222, %p223
      %s225 = ssub.s32 %s23, %s30
      %p226 = scmp.eq.s32.totalorder %s225, 0
      %s228 = sadd.s32 %s227, 1
      %s229 = scalar_select %p226, %s227, %s228
      %p232 = pneg %p226
      %p233 = scmp.eq.s32.totalorder %s23, 1
      %p234 = por %p232, %p233
      %p235 = scmp.ne.s32.totalorder %s227, %s230
      %p236 = scmp.eq.s32.totalorder %s23, 0
      %p237 = por %p235, %p236
      %p238 = scmp.ne.s32.totalorder %s227, %s230
      %p239 = scmp.eq.s32.totalorder %s28, 1
      %p240 = por %p238, %p239
      %p241 = scmp.ne.s32.totalorder %s230, %s231
      %p242 = scmp.eq.s32.totalorder %s28, 0
      %p243 = por %p241, %p242
      %p244 = scmp.ne.s32.totalorder %s230, %s231
      %p245 = scmp.eq.s32.totalorder %s29, 1
      %p246 = por %p244, %p245
      %p248 = scmp.ne.s32.totalorder %s231, %s247
      %p249 = scmp.eq.s32.totalorder %s29, 0
      %p250 = por %p248, %p249
      %p251 = scmp.le.s32.totalorder 1, %s23
      %p252 = scmp.lt.s32.totalorder %s23, 3
      %p253 = pnand %p251, %p252
      %p254 = pneg %p253
      // Predicated region
      $region9: #{tpu_custom_call.1} parent=5 // pred_check
        _
      $region10: #{tpu_custom_call.1} parent=5 // pred_check_branch
        %256 = sbr.rel (%p253) target = $region12
      $region11: #{tpu_custom_call.1} parent=5 // pred_region
        %s257 = ssub.s32 %s23, 1
        // Predicated region
        $region13: #{tpu_custom_call.1} parent=11 // pred_check
          %p258 = pneg %p70
        $region14: #{tpu_custom_call.1} parent=11 // pred_check_branch
          %260 = sbr.rel (%p258) target = $region16
        $region15: #{tpu_custom_call.1} parent=11 // pred_region
          %262 = vsyncadd [#allocation6], 0
          %s263 = sshll.u32 %s1, 4
          %s264 = int_to_ptr.hbm [resolvable:$true] %s263
          %s265 = sshll.u32 [#allocation5], 4
          %s266 = int_to_ptr.vmem [resolvable:$true] %s265
          %271 = dma.hbm_to_vmem [thread:$0]  %s264, 1024, %s266, [#allocation6], 64, 64, 4
        $region16: #{tpu_custom_call.1} parent=11 // pred_fallthru
          _
        // Predicated region
        $region17: #{tpu_custom_call.1} parent=11 // pred_check
          %p272 = pneg %p91
        $region18: #{tpu_custom_call.1} parent=11 // pred_check_branch
          %274 = sbr.rel (%p272) target = $region20
        $region19: #{tpu_custom_call.1} parent=11 // pred_region
          _
        $region20: #{tpu_custom_call.1} parent=11 // pred_fallthru
          _
        // Predicated region
        $region21: #{tpu_custom_call.1} parent=11 // pred_check
          %p275 = pneg %p112
        $region22: #{tpu_custom_call.1} parent=11 // pred_check_branch
          %277 = sbr.rel (%p275) target = $region24
        $region23: #{tpu_custom_call.1} parent=11 // pred_region
          %279 = vsyncadd [#allocation6], 0
          %s280 = sshll.u32 %s3, 4
          %s281 = int_to_ptr.hbm [resolvable:$true] %s280
          %s282 = sshll.u32 [#allocation7], 4
          %s283 = int_to_ptr.vmem [resolvable:$true] %s282
          %288 = dma.hbm_to_vmem [thread:$0]  %s281, 1024, %s283, [#allocation6], 64, 64, 4
        $region24: #{tpu_custom_call.1} parent=11 // pred_fallthru
          _
        // Predicated region
        $region25: #{tpu_custom_call.1} parent=11 // pred_check
          %p289 = pneg %p133
        $region26: #{tpu_custom_call.1} parent=11 // pred_check_branch
          %291 = sbr.rel (%p289) target = $region28
        $region27: #{tpu_custom_call.1} parent=11 // pred_region
          _
        $region28: #{tpu_custom_call.1} parent=11 // pred_fallthru
          _
        // Predicated region
        $region29: #{tpu_custom_call.1} parent=11 // pred_check
          %p292 = pneg %p154
        $region30: #{tpu_custom_call.1} parent=11 // pred_check_branch
          %294 = sbr.rel (%p292) target = $region32
        $region31: #{tpu_custom_call.1} parent=11 // pred_region
          %296 = vsyncadd [#allocation9], 0
          %s297 = sshll.u32 %s5, 4
          %s298 = int_to_ptr.hbm [resolvable:$true] %s297
          %s299 = sshll.u32 [#allocation8], 4
          %s300 = int_to_ptr.vmem [resolvable:$true] %s299
          %305 = dma.hbm_to_vmem [thread:$0]  %s298, 1024, %s300, [#allocation9], 64, 64, 4
        $region32: #{tpu_custom_call.1} parent=11 // pred_fallthru
          _
        // Predicated region
        $region33: #{tpu_custom_call.1} parent=11 // pred_check
          %p306 = pneg %p175
        $region34: #{tpu_custom_call.1} parent=11 // pred_check_branch
          %308 = sbr.rel (%p306) target = $region36
        $region35: #{tpu_custom_call.1} parent=11 // pred_region
          _
        $region36: #{tpu_custom_call.1} parent=11 // pred_fallthru
          _
        // Predicated region
        $region37: #{tpu_custom_call.1} parent=11 // pred_check
          %p309 = pneg %p196
        $region38: #{tpu_custom_call.1} parent=11 // pred_check_branch
          %311 = sbr.rel (%p309) target = $region40
        $region39: #{tpu_custom_call.1} parent=11 // pred_region
          %313 = vsyncadd [#allocation9], 0
          %s314 = sshll.u32 %s7, 4
          %s315 = int_to_ptr.hbm [resolvable:$true] %s314
          %s316 = sshll.u32 [#allocation10], 4
          %s317 = int_to_ptr.vmem [resolvable:$true] %s316
          %322 = dma.hbm_to_vmem [thread:$0]  %s315, 1024, %s317, [#allocation9], 64, 64, 4
        $region40: #{tpu_custom_call.1} parent=11 // pred_fallthru
          _
        // Predicated region
        $region41: #{tpu_custom_call.1} parent=11 // pred_check
          %p323 = pneg %p217
        $region42: #{tpu_custom_call.1} parent=11 // pred_check_branch
          %325 = sbr.rel (%p323) target = $region44
        $region43: #{tpu_custom_call.1} parent=11 // pred_region
          _
        $region44: #{tpu_custom_call.1} parent=11 // pred_fallthru
          _
      $region12: #{tpu_custom_call.1} parent=5 // pred_fallthru
        _
      %p326 = scmp.lt.s32.totalorder %s23, 2
      // Predicated region
      $region45: #{tpu_custom_call.1} parent=5 // pred_check
        %p327 = pneg %p326
      $region46: #{tpu_custom_call.1} parent=5 // pred_check_branch
        %329 = sbr.rel (%p327) target = $region48
      $region47: #{tpu_custom_call.1} parent=5 // pred_region
        // Predicated region
        $region49: #{tpu_custom_call.1} parent=47 // pred_check
          %p330 = pneg %p43
        $region50: #{tpu_custom_call.1} parent=47 // pred_check_branch
          %332 = sbr.rel (%p330) target = $region52
        $region51: #{tpu_custom_call.1} parent=47 // pred_region
          %s333 = sand.u32 %s33, 1
          %s334 = scalar_lea.sflag [#allocation3], %s333
          %s335 = sand.u32 %s33, 1
          %s336 = smul.addr %s335, 64
          %s337 = scalar_lea.vmem [#allocation2], %s336
          %s338 = smul.u32 16, %s23
          %340 = vsyncadd %s334, 0
          %s341 = smul.addr %s338, 4
          %s342 = scalar_lea.hbm %s0, %s341
          %s343 = sshll.u32 %s342, 4
          %s344 = int_to_ptr.hbm [resolvable:$true] %s343
          %s345 = sshll.u32 %s337, 4
          %s346 = int_to_ptr.vmem [resolvable:$true] %s345
          %351 = dma.hbm_to_vmem [thread:$0]  %s344, 1024, %s346, %s334, 64, 64, 4
        $region52: #{tpu_custom_call.1} parent=47 // pred_fallthru
          _
      $region48: #{tpu_custom_call.1} parent=5 // pred_fallthru
        _
      %p352 = scmp.le.s32.totalorder 1, %s23
      %p353 = scmp.lt.s32.totalorder %s23, 3
      %p354 = pnand %p352, %p353
      %p355 = pneg %p354
      // Predicated region
      $region53: #{tpu_custom_call.1} parent=5 // pred_check
        _
      $region54: #{tpu_custom_call.1} parent=5 // pred_check_branch
        %357 = sbr.rel (%p354) target = $region56
      $region55: #{tpu_custom_call.1} parent=5 // pred_region
        %s358 = ssub.s32 %s23, 1
        %s359 = sand.u32 %s36, 1
        %s360 = scalar_lea.sflag [#allocation3], %s359
        %s361 = sand.u32 %s36, 1
        %s362 = smul.addr %s361, 64
        %s363 = scalar_lea.vmem [#allocation2], %s362
        // Predicated region
        $region57: #{tpu_custom_call.1} parent=55 // pred_check
          %p364 = pneg %p49
        $region58: #{tpu_custom_call.1} parent=55 // pred_check_branch
          %366 = sbr.rel (%p364) target = $region60
        $region59: #{tpu_custom_call.1} parent=55 // pred_region
          %368 = dma.done %s360, 1024
        $region60: #{tpu_custom_call.1} parent=55 // pred_fallthru
          _
        // Predicated region
        $region61: #{tpu_custom_call.1} parent=55 // pred_check
          %p369 = pneg %p70
        $region62: #{tpu_custom_call.1} parent=55 // pred_check_branch
          %371 = sbr.rel (%p369) target = $region64
        $region63: #{tpu_custom_call.1} parent=55 // pred_region
          %373 = dma.done [#allocation6], 1024
        $region64: #{tpu_custom_call.1} parent=55 // pred_fallthru
          _
        // Predicated region
        $region65: #{tpu_custom_call.1} parent=55 // pred_check
          %p374 = pneg %p112
        $region66: #{tpu_custom_call.1} parent=55 // pred_check_branch
          %376 = sbr.rel (%p374) target = $region68
        $region67: #{tpu_custom_call.1} parent=55 // pred_region
          %378 = dma.done [#allocation6], 1024
        $region68: #{tpu_custom_call.1} parent=55 // pred_fallthru
          _
        // Predicated region
        $region69: #{tpu_custom_call.1} parent=55 // pred_check
          %p379 = pneg %p154
        $region70: #{tpu_custom_call.1} parent=55 // pred_check_branch
          %381 = sbr.rel (%p379) target = $region72
        $region71: #{tpu_custom_call.1} parent=55 // pred_region
          %383 = dma.done [#allocation9], 1024
        $region72: #{tpu_custom_call.1} parent=55 // pred_fallthru
          _
        // Predicated region
        $region73: #{tpu_custom_call.1} parent=55 // pred_check
          %p384 = pneg %p196
        $region74: #{tpu_custom_call.1} parent=55 // pred_check_branch
          %386 = sbr.rel (%p384) target = $region76
        $region75: #{tpu_custom_call.1} parent=55 // pred_region
          %388 = dma.done [#allocation9], 1024
        $region76: #{tpu_custom_call.1} parent=55 // pred_fallthru
          _
        %s389 = sand.u32 %s36, 1
        %s390 = scalar_lea.sflag [#allocation3], %s389
        %s391 = sand.u32 %s36, 1
        %s392 = smul.addr %s391, 64
        %s393 = scalar_lea.vmem [#allocation2], %s392
        %p394 = pneg %p49
        %p395 = pneg %p46
        %p396 = pneg %p70
        %p397 = pneg %p67
        %p398 = pneg %p91
        %p399 = pneg %p88
        %p400 = pneg %p112
        %p401 = pneg %p109
        %p402 = pneg %p133
        %p403 = pneg %p130
        %p404 = pneg %p154
        %p405 = pneg %p151
        %p406 = pneg %p175
        %p407 = pneg %p172
        %p408 = pneg %p196
        %p409 = pneg %p193
        %p410 = pneg %p217
        %p411 = pneg %p214
        %p412 = pneg %p243
        %p413 = pneg %p240
        %s414 = sand.u32 %s230, 1
        %s415 = scalar_lea.sflag [#allocation4], %s414
        %s416 = sand.u32 %s230, 1
        %s417 = smul.addr %s416, 128
        %s418 = scalar_lea.vmem [#allocation11], %s417
        %s419 = smul.u32 16, %s28
        %s420 = smul.u32 16, %s28
        %v421 = vld [vmem:[%s363] sm:$0xf]
        %v422 = vld [vmem:[%s363 + $0x4] sm:$0xf]
        %v423 = vld [vmem:[%s363 + $0x8] sm:$0xf]
        %v424 = vld [vmem:[%s363 + $0xc] sm:$0xf]
        %v425 = vld [vmem:[%s363 + $0x10] sm:$0xf]
        %v426 = vld [vmem:[%s363 + $0x14] sm:$0xf]
        %v427 = vld [vmem:[%s363 + $0x18] sm:$0xf]
        %v428 = vld [vmem:[%s363 + $0x1c] sm:$0xf]
        %v429 = vld [vmem:[%s363 + $0x20] sm:$0xf]
        %v430 = vld [vmem:[%s363 + $0x24] sm:$0xf]
        %v431 = vld [vmem:[%s363 + $0x28] sm:$0xf]
        %v432 = vld [vmem:[%s363 + $0x2c] sm:$0xf]
        %v433 = vld [vmem:[%s363 + $0x30] sm:$0xf]
        %v434 = vld [vmem:[%s363 + $0x34] sm:$0xf]
        %v435 = vld [vmem:[%s363 + $0x38] sm:$0xf]
        %v436 = vld [vmem:[%s363 + $0x3c] sm:$0xf]
        %v437 = vld [vmem:[#allocation5] sm:$0xf]
        %v438 = vld [vmem:[#allocation5 + $0x4] sm:$0xf]
        %v439 = vld [vmem:[#allocation5 + $0x8] sm:$0xf]
        %v440 = vld [vmem:[#allocation5 + $0xc] sm:$0xf]
        %v441 = vld [vmem:[#allocation5 + $0x10] sm:$0xf]
        %v442 = vld [vmem:[#allocation5 + $0x14] sm:$0xf]
        %v443 = vld [vmem:[#allocation5 + $0x18] sm:$0xf]
        %v444 = vld [vmem:[#allocation5 + $0x1c] sm:$0xf]
        %v445 = vld [vmem:[#allocation5 + $0x20] sm:$0xf]
        %v446 = vld [vmem:[#allocation5 + $0x24] sm:$0xf]
        %v447 = vld [vmem:[#allocation5 + $0x28] sm:$0xf]
        %v448 = vld [vmem:[#allocation5 + $0x2c] sm:$0xf]
        %v449 = vld [vmem:[#allocation5 + $0x30] sm:$0xf]
        %v450 = vld [vmem:[#allocation5 + $0x34] sm:$0xf]
        %v451 = vld [vmem:[#allocation5 + $0x38] sm:$0xf]
        %v452 = vld [vmem:[#allocation5 + $0x3c] sm:$0xf]
        %v453 = vld [vmem:[%s2] sm:$0x1]
        %v455 = vperm.slane %v453, 0
        %v473 = vunpack.c.l.b16 %v421
        %v474 = vunpack.c.l.b16 %v422
        %v475 = vunpack.c.l.b16 %v423
        %v476 = vunpack.c.l.b16 %v424
        %v477 = vunpack.c.l.b16 %v425
        %v478 = vunpack.c.l.b16 %v426
        %v479 = vunpack.c.l.b16 %v427
        %v480 = vunpack.c.l.b16 %v428
        %v481 = vunpack.c.l.b16 %v429
        %v482 = vunpack.c.l.b16 %v430
        %v483 = vunpack.c.l.b16 %v431
        %v484 = vunpack.c.l.b16 %v432
        %v485 = vunpack.c.l.b16 %v433
        %v486 = vunpack.c.l.b16 %v434
        %v487 = vunpack.c.l.b16 %v435
        %v488 = vunpack.c.l.b16 %v436
        %v489 = vpack.c.b16 %v474, %v473
        %v490 = vpack.c.b16 %v476, %v475
        %v491 = vpack.c.b16 %v478, %v477
        %v492 = vpack.c.b16 %v480, %v479
        %v493 = vpack.c.b16 %v482, %v481
        %v494 = vpack.c.b16 %v484, %v483
        %v495 = vpack.c.b16 %v486, %v485
        %v496 = vpack.c.b16 %v488, %v487
        %v521 = vunpack.c.l.b16 %v437
        %v522 = vunpack.c.l.b16 %v438
        %v523 = vunpack.c.l.b16 %v439
        %v524 = vunpack.c.l.b16 %v440
        %v525 = vunpack.c.l.b16 %v441
        %v526 = vunpack.c.l.b16 %v442
        %v527 = vunpack.c.l.b16 %v443
        %v528 = vunpack.c.l.b16 %v444
        %v529 = vunpack.c.l.b16 %v445
        %v530 = vunpack.c.l.b16 %v446
        %v531 = vunpack.c.l.b16 %v447
        %v532 = vunpack.c.l.b16 %v448
        %v533 = vunpack.c.l.b16 %v449
        %v534 = vunpack.c.l.b16 %v450
        %v535 = vunpack.c.l.b16 %v451
        %v536 = vunpack.c.l.b16 %v452
        %v537 = vpack.c.b16 %v522, %v521
        %v538 = vpack.c.b16 %v524, %v523
        %v539 = vpack.c.b16 %v526, %v525
        %v540 = vpack.c.b16 %v528, %v527
        %v541 = vpack.c.b16 %v530, %v529
        %v542 = vpack.c.b16 %v532, %v531
        %v543 = vpack.c.b16 %v534, %v533
        %v544 = vpack.c.b16 %v536, %v535
        %553 = vmatpush.bf16.msra.mxu0 %v544
        %554 = vmatpush.bf16.msra.mxu0 %v543
        %555 = vmatpush.bf16.msra.mxu0 %v542
        %556 = vmatpush.bf16.msra.mxu0 %v541
        %557 = vmatpush.bf16.msra.mxu0 %v540
        %558 = vmatpush.bf16.msra.mxu0 %v539
        %559 = vmatpush.bf16.msra.mxu0 %v538
        %560 = vmatpush.bf16.msra.mxu0 %v537
        %561 = vmatmul.bf16.gmra.mxu0 %v489
        %v562 = vpop.f32.mrf.mxu0
        %v563 = vadd.f32 %v455, %v562
        %v564 = vpop.f32.mrf.mxu0
        %v565 = vadd.f32 %v455, %v564
        %566 = vmatmul.bf16.gmra.mxu0 %v490
        %v567 = vpop.f32.mrf.mxu0
        %v568 = vadd.f32 %v455, %v567
        %v569 = vpop.f32.mrf.mxu0
        %v570 = vadd.f32 %v455, %v569
        %571 = vmatmul.bf16.gmra.mxu0 %v491
        %v572 = vpop.f32.mrf.mxu0
        %v573 = vadd.f32 %v455, %v572
        %v574 = vpop.f32.mrf.mxu0
        %v575 = vadd.f32 %v455, %v574
        %576 = vmatmul.bf16.gmra.mxu0 %v492
        %v577 = vpop.f32.mrf.mxu0
        %v578 = vadd.f32 %v455, %v577
        %v579 = vpop.f32.mrf.mxu0
        %v580 = vadd.f32 %v455, %v579
        %581 = vmatmul.bf16.gmra.mxu0 %v493
        %v582 = vpop.f32.mrf.mxu0
        %v583 = vadd.f32 %v455, %v582
        %v584 = vpop.f32.mrf.mxu0
        %v585 = vadd.f32 %v455, %v584
        %586 = vmatmul.bf16.gmra.mxu0 %v494
        %v587 = vpop.f32.mrf.mxu0
        %v588 = vadd.f32 %v455, %v587
        %v589 = vpop.f32.mrf.mxu0
        %v590 = vadd.f32 %v455, %v589
        %591 = vmatmul.bf16.gmra.mxu0 %v495
        %v592 = vpop.f32.mrf.mxu0
        %v593 = vadd.f32 %v455, %v592
        %v594 = vpop.f32.mrf.mxu0
        %v595 = vadd.f32 %v455, %v594
        %596 = vmatmul.bf16.gmra.mxu0 %v496
        %v597 = vpop.f32.mrf.mxu0
        %v598 = vadd.f32 %v455, %v597
        %v599 = vpop.f32.mrf.mxu0
        %v600 = vadd.f32 %v455, %v599
        %601 = vdwg.mxu0
        %v602 = vtanh.pop %v563
        %v603 = vtanh.pop %v565
        %v604 = vtanh.pop %v568
        %v605 = vtanh.pop %v570
        %v606 = vtanh.pop %v573
        %v607 = vtanh.pop %v575
        %v608 = vtanh.pop %v578
        %v609 = vtanh.pop %v580
        %v610 = vtanh.pop %v583
        %v611 = vtanh.pop %v585
        %v612 = vtanh.pop %v588
        %v613 = vtanh.pop %v590
        %v614 = vtanh.pop %v593
        %v615 = vtanh.pop %v595
        %v616 = vtanh.pop %v598
        %v617 = vtanh.pop %v600
        %v618 = vpack.c.bf16 %v603, %v602
        %v619 = vpack.c.bf16 %v605, %v604
        %v620 = vpack.c.bf16 %v607, %v606
        %v621 = vpack.c.bf16 %v609, %v608
        %v622 = vpack.c.bf16 %v611, %v610
        %v623 = vpack.c.bf16 %v613, %v612
        %v624 = vpack.c.bf16 %v615, %v614
        %v625 = vpack.c.bf16 %v617, %v616
        %v626 = vld [vmem:[#allocation7] sm:$0xf]
        %v627 = vld [vmem:[#allocation7 + $0x4] sm:$0xf]
        %v628 = vld [vmem:[#allocation7 + $0x8] sm:$0xf]
        %v629 = vld [vmem:[#allocation7 + $0xc] sm:$0xf]
        %v630 = vld [vmem:[#allocation7 + $0x10] sm:$0xf]
        %v631 = vld [vmem:[#allocation7 + $0x14] sm:$0xf]
        %v632 = vld [vmem:[#allocation7 + $0x18] sm:$0xf]
        %v633 = vld [vmem:[#allocation7 + $0x1c] sm:$0xf]
        %v634 = vld [vmem:[#allocation7 + $0x20] sm:$0xf]
        %v635 = vld [vmem:[#allocation7 + $0x24] sm:$0xf]
        %v636 = vld [vmem:[#allocation7 + $0x28] sm:$0xf]
        %v637 = vld [vmem:[#allocation7 + $0x2c] sm:$0xf]
        %v638 = vld [vmem:[#allocation7 + $0x30] sm:$0xf]
        %v639 = vld [vmem:[#allocation7 + $0x34] sm:$0xf]
        %v640 = vld [vmem:[#allocation7 + $0x38] sm:$0xf]
        %v641 = vld [vmem:[#allocation7 + $0x3c] sm:$0xf]
        %v642 = vld [vmem:[%s4] sm:$0x1]
        %v644 = vperm.slane %v642, 0
        %v662 = vunpack.c.l.b16 %v626
        %v663 = vunpack.c.l.b16 %v627
        %v664 = vunpack.c.l.b16 %v628
        %v665 = vunpack.c.l.b16 %v629
        %v666 = vunpack.c.l.b16 %v630
        %v667 = vunpack.c.l.b16 %v631
        %v668 = vunpack.c.l.b16 %v632
        %v669 = vunpack.c.l.b16 %v633
        %v670 = vunpack.c.l.b16 %v634
        %v671 = vunpack.c.l.b16 %v635
        %v672 = vunpack.c.l.b16 %v636
        %v673 = vunpack.c.l.b16 %v637
        %v674 = vunpack.c.l.b16 %v638
        %v675 = vunpack.c.l.b16 %v639
        %v676 = vunpack.c.l.b16 %v640
        %v677 = vunpack.c.l.b16 %v641
        %v678 = vpack.c.b16 %v663, %v662
        %v679 = vpack.c.b16 %v665, %v664
        %v680 = vpack.c.b16 %v667, %v666
        %v681 = vpack.c.b16 %v669, %v668
        %v682 = vpack.c.b16 %v671, %v670
        %v683 = vpack.c.b16 %v673, %v672
        %v684 = vpack.c.b16 %v675, %v674
        %v685 = vpack.c.b16 %v677, %v676
        %694 = vmatpush.bf16.msra.mxu0 %v685
        %695 = vmatpush.bf16.msra.mxu0 %v684
        %696 = vmatpush.bf16.msra.mxu0 %v683
        %697 = vmatpush.bf16.msra.mxu0 %v682
        %698 = vmatpush.bf16.msra.mxu0 %v681
        %699 = vmatpush.bf16.msra.mxu0 %v680
        %700 = vmatpush.bf16.msra.mxu0 %v679
        %701 = vmatpush.bf16.msra.mxu0 %v678
        %702 = vmatmul.bf16.gmra.mxu0 %v618
        %v703 = vpop.f32.mrf.mxu0
        %v704 = vadd.f32 %v644, %v703
        %v705 = vpop.f32.mrf.mxu0
        %v706 = vadd.f32 %v644, %v705
        %707 = vmatmul.bf16.gmra.mxu0 %v619
        %v708 = vpop.f32.mrf.mxu0
        %v709 = vadd.f32 %v644, %v708
        %v710 = vpop.f32.mrf.mxu0
        %v711 = vadd.f32 %v644, %v710
        %712 = vmatmul.bf16.gmra.mxu0 %v620
        %v713 = vpop.f32.mrf.mxu0
        %v714 = vadd.f32 %v644, %v713
        %v715 = vpop.f32.mrf.mxu0
        %v716 = vadd.f32 %v644, %v715
        %717 = vmatmul.bf16.gmra.mxu0 %v621
        %v718 = vpop.f32.mrf.mxu0
        %v719 = vadd.f32 %v644, %v718
        %v720 = vpop.f32.mrf.mxu0
        %v721 = vadd.f32 %v644, %v720
        %722 = vmatmul.bf16.gmra.mxu0 %v622
        %v723 = vpop.f32.mrf.mxu0
        %v724 = vadd.f32 %v644, %v723
        %v725 = vpop.f32.mrf.mxu0
        %v726 = vadd.f32 %v644, %v725
        %727 = vmatmul.bf16.gmra.mxu0 %v623
        %v728 = vpop.f32.mrf.mxu0
        %v729 = vadd.f32 %v644, %v728
        %v730 = vpop.f32.mrf.mxu0
        %v731 = vadd.f32 %v644, %v730
        %732 = vmatmul.bf16.gmra.mxu0 %v624
        %v733 = vpop.f32.mrf.mxu0
        %v734 = vadd.f32 %v644, %v733
        %v735 = vpop.f32.mrf.mxu0
        %v736 = vadd.f32 %v644, %v735
        %737 = vmatmul.bf16.gmra.mxu0 %v625
        %v738 = vpop.f32.mrf.mxu0
        %v739 = vadd.f32 %v644, %v738
        %v740 = vpop.f32.mrf.mxu0
        %v741 = vadd.f32 %v644, %v740
        %742 = vdwg.mxu0
        %v743 = vtanh.pop %v704
        %v744 = vtanh.pop %v706
        %v745 = vtanh.pop %v709
        %v746 = vtanh.pop %v711
        %v747 = vtanh.pop %v714
        %v748 = vtanh.pop %v716
        %v749 = vtanh.pop %v719
        %v750 = vtanh.pop %v721
        %v751 = vtanh.pop %v724
        %v752 = vtanh.pop %v726
        %v753 = vtanh.pop %v729
        %v754 = vtanh.pop %v731
        %v755 = vtanh.pop %v734
        %v756 = vtanh.pop %v736
        %v757 = vtanh.pop %v739
        %v758 = vtanh.pop %v741
        %v759 = vpack.c.bf16 %v744, %v743
        %v760 = vpack.c.bf16 %v746, %v745
        %v761 = vpack.c.bf16 %v748, %v747
        %v762 = vpack.c.bf16 %v750, %v749
        %v763 = vpack.c.bf16 %v752, %v751
        %v764 = vpack.c.bf16 %v754, %v753
        %v765 = vpack.c.bf16 %v756, %v755
        %v766 = vpack.c.bf16 %v758, %v757
        %v767 = vld [vmem:[#allocation8] sm:$0xf]
        %v768 = vld [vmem:[#allocation8 + $0x4] sm:$0xf]
        %v769 = vld [vmem:[#allocation8 + $0x8] sm:$0xf]
        %v770 = vld [vmem:[#allocation8 + $0xc] sm:$0xf]
        %v771 = vld [vmem:[#allocation8 + $0x10] sm:$0xf]
        %v772 = vld [vmem:[#allocation8 + $0x14] sm:$0xf]
        %v773 = vld [vmem:[#allocation8 + $0x18] sm:$0xf]
        %v774 = vld [vmem:[#allocation8 + $0x1c] sm:$0xf]
        %v775 = vld [vmem:[#allocation8 + $0x20] sm:$0xf]
        %v776 = vld [vmem:[#allocation8 + $0x24] sm:$0xf]
        %v777 = vld [vmem:[#allocation8 + $0x28] sm:$0xf]
        %v778 = vld [vmem:[#allocation8 + $0x2c] sm:$0xf]
        %v779 = vld [vmem:[#allocation8 + $0x30] sm:$0xf]
        %v780 = vld [vmem:[#allocation8 + $0x34] sm:$0xf]
        %v781 = vld [vmem:[#allocation8 + $0x38] sm:$0xf]
        %v782 = vld [vmem:[#allocation8 + $0x3c] sm:$0xf]
        %v783 = vld [vmem:[%s6] sm:$0x1]
        %v785 = vperm.slane %v783, 0
        %v803 = vunpack.c.l.b16 %v767
        %v804 = vunpack.c.l.b16 %v768
        %v805 = vunpack.c.l.b16 %v769
        %v806 = vunpack.c.l.b16 %v770
        %v807 = vunpack.c.l.b16 %v771
        %v808 = vunpack.c.l.b16 %v772
        %v809 = vunpack.c.l.b16 %v773
        %v810 = vunpack.c.l.b16 %v774
        %v811 = vunpack.c.l.b16 %v775
        %v812 = vunpack.c.l.b16 %v776
        %v813 = vunpack.c.l.b16 %v777
        %v814 = vunpack.c.l.b16 %v778
        %v815 = vunpack.c.l.b16 %v779
        %v816 = vunpack.c.l.b16 %v780
        %v817 = vunpack.c.l.b16 %v781
        %v818 = vunpack.c.l.b16 %v782
        %v819 = vpack.c.b16 %v804, %v803
        %v820 = vpack.c.b16 %v806, %v805
        %v821 = vpack.c.b16 %v808, %v807
        %v822 = vpack.c.b16 %v810, %v809
        %v823 = vpack.c.b16 %v812, %v811
        %v824 = vpack.c.b16 %v814, %v813
        %v825 = vpack.c.b16 %v816, %v815
        %v826 = vpack.c.b16 %v818, %v817
        %835 = vmatpush.bf16.msra.mxu0 %v826
        %836 = vmatpush.bf16.msra.mxu0 %v825
        %837 = vmatpush.bf16.msra.mxu0 %v824
        %838 = vmatpush.bf16.msra.mxu0 %v823
        %839 = vmatpush.bf16.msra.mxu0 %v822
        %840 = vmatpush.bf16.msra.mxu0 %v821
        %841 = vmatpush.bf16.msra.mxu0 %v820
        %842 = vmatpush.bf16.msra.mxu0 %v819
        %843 = vmatmul.bf16.gmra.mxu0 %v759
        %v844 = vpop.f32.mrf.mxu0
        %v845 = vadd.f32 %v785, %v844
        %v846 = vpop.f32.mrf.mxu0
        %v847 = vadd.f32 %v785, %v846
        %848 = vmatmul.bf16.gmra.mxu0 %v760
        %v849 = vpop.f32.mrf.mxu0
        %v850 = vadd.f32 %v785, %v849
        %v851 = vpop.f32.mrf.mxu0
        %v852 = vadd.f32 %v785, %v851
        %853 = vmatmul.bf16.gmra.mxu0 %v761
        %v854 = vpop.f32.mrf.mxu0
        %v855 = vadd.f32 %v785, %v854
        %v856 = vpop.f32.mrf.mxu0
        %v857 = vadd.f32 %v785, %v856
        %858 = vmatmul.bf16.gmra.mxu0 %v762
        %v859 = vpop.f32.mrf.mxu0
        %v860 = vadd.f32 %v785, %v859
        %v861 = vpop.f32.mrf.mxu0
        %v862 = vadd.f32 %v785, %v861
        %863 = vmatmul.bf16.gmra.mxu0 %v763
        %v864 = vpop.f32.mrf.mxu0
        %v865 = vadd.f32 %v785, %v864
        %v866 = vpop.f32.mrf.mxu0
        %v867 = vadd.f32 %v785, %v866
        %868 = vmatmul.bf16.gmra.mxu0 %v764
        %v869 = vpop.f32.mrf.mxu0
        %v870 = vadd.f32 %v785, %v869
        %v871 = vpop.f32.mrf.mxu0
        %v872 = vadd.f32 %v785, %v871
        %873 = vmatmul.bf16.gmra.mxu0 %v765
        %v874 = vpop.f32.mrf.mxu0
        %v875 = vadd.f32 %v785, %v874
        %v876 = vpop.f32.mrf.mxu0
        %v877 = vadd.f32 %v785, %v876
        %878 = vmatmul.bf16.gmra.mxu0 %v766
        %v879 = vpop.f32.mrf.mxu0
        %v880 = vadd.f32 %v785, %v879
        %v881 = vpop.f32.mrf.mxu0
        %v882 = vadd.f32 %v785, %v881
        %883 = vdwg.mxu0
        %v884 = vtanh.pop %v845
        %v885 = vtanh.pop %v847
        %v886 = vtanh.pop %v850
        %v887 = vtanh.pop %v852
        %v888 = vtanh.pop %v855
        %v889 = vtanh.pop %v857
        %v890 = vtanh.pop %v860
        %v891 = vtanh.pop %v862
        %v892 = vtanh.pop %v865
        %v893 = vtanh.pop %v867
        %v894 = vtanh.pop %v870
        %v895 = vtanh.pop %v872
        %v896 = vtanh.pop %v875
        %v897 = vtanh.pop %v877
        %v898 = vtanh.pop %v880
        %v899 = vtanh.pop %v882
        %v900 = vpack.c.bf16 %v885, %v884
        %v901 = vpack.c.bf16 %v887, %v886
        %v902 = vpack.c.bf16 %v889, %v888
        %v903 = vpack.c.bf16 %v891, %v890
        %v904 = vpack.c.bf16 %v893, %v892
        %v905 = vpack.c.bf16 %v895, %v894
        %v906 = vpack.c.bf16 %v897, %v896
        %v907 = vpack.c.bf16 %v899, %v898
        %v908 = vld [vmem:[#allocation10] sm:$0xf]
        %v909 = vld [vmem:[#allocation10 + $0x4] sm:$0xf]
        %v910 = vld [vmem:[#allocation10 + $0x8] sm:$0xf]
        %v911 = vld [vmem:[#allocation10 + $0xc] sm:$0xf]
        %v912 = vld [vmem:[#allocation10 + $0x10] sm:$0xf]
        %v913 = vld [vmem:[#allocation10 + $0x14] sm:$0xf]
        %v914 = vld [vmem:[#allocation10 + $0x18] sm:$0xf]
        %v915 = vld [vmem:[#allocation10 + $0x1c] sm:$0xf]
        %v916 = vld [vmem:[#allocation10 + $0x20] sm:$0xf]
        %v917 = vld [vmem:[#allocation10 + $0x24] sm:$0xf]
        %v918 = vld [vmem:[#allocation10 + $0x28] sm:$0xf]
        %v919 = vld [vmem:[#allocation10 + $0x2c] sm:$0xf]
        %v920 = vld [vmem:[#allocation10 + $0x30] sm:$0xf]
        %v921 = vld [vmem:[#allocation10 + $0x34] sm:$0xf]
        %v922 = vld [vmem:[#allocation10 + $0x38] sm:$0xf]
        %v923 = vld [vmem:[#allocation10 + $0x3c] sm:$0xf]
        %v924 = vld [vmem:[%s8] sm:$0x1]
        %v926 = vperm.slane %v924, 0
        %v944 = vunpack.c.l.b16 %v908
        %v945 = vunpack.c.l.b16 %v909
        %v946 = vunpack.c.l.b16 %v910
        %v947 = vunpack.c.l.b16 %v911
        %v948 = vunpack.c.l.b16 %v912
        %v949 = vunpack.c.l.b16 %v913
        %v950 = vunpack.c.l.b16 %v914
        %v951 = vunpack.c.l.b16 %v915
        %v952 = vunpack.c.l.b16 %v916
        %v953 = vunpack.c.l.b16 %v917
        %v954 = vunpack.c.l.b16 %v918
        %v955 = vunpack.c.l.b16 %v919
        %v956 = vunpack.c.l.b16 %v920
        %v957 = vunpack.c.l.b16 %v921
        %v958 = vunpack.c.l.b16 %v922
        %v959 = vunpack.c.l.b16 %v923
        %v960 = vpack.c.b16 %v945, %v944
        %v961 = vpack.c.b16 %v947, %v946
        %v962 = vpack.c.b16 %v949, %v948
        %v963 = vpack.c.b16 %v951, %v950
        %v964 = vpack.c.b16 %v953, %v952
        %v965 = vpack.c.b16 %v955, %v954
        %v966 = vpack.c.b16 %v957, %v956
        %v967 = vpack.c.b16 %v959, %v958
        %976 = vmatpush.bf16.msra.mxu0 %v967
        %977 = vmatpush.bf16.msra.mxu0 %v966
        %978 = vmatpush.bf16.msra.mxu0 %v965
        %979 = vmatpush.bf16.msra.mxu0 %v964
        %980 = vmatpush.bf16.msra.mxu0 %v963
        %981 = vmatpush.bf16.msra.mxu0 %v962
        %982 = vmatpush.bf16.msra.mxu0 %v961
        %983 = vmatpush.bf16.msra.mxu0 %v960
        %984 = vmatmul.bf16.gmra.mxu0 %v900
        %v985 = vpop.f32.mrf.mxu0
        %v986 = vadd.f32 %v926, %v985
        %v987 = vpop.f32.mrf.mxu0
        %v988 = vadd.f32 %v926, %v987
        %989 = vmatmul.bf16.gmra.mxu0 %v901
        %v990 = vpop.f32.mrf.mxu0
        %v991 = vadd.f32 %v926, %v990
        %v992 = vpop.f32.mrf.mxu0
        %v993 = vadd.f32 %v926, %v992
        %994 = vmatmul.bf16.gmra.mxu0 %v902
        %v995 = vpop.f32.mrf.mxu0
        %v996 = vadd.f32 %v926, %v995
        %v997 = vpop.f32.mrf.mxu0
        %v998 = vadd.f32 %v926, %v997
        %999 = vmatmul.bf16.gmra.mxu0 %v903
        %v1000 = vpop.f32.mrf.mxu0
        %v1001 = vadd.f32 %v926, %v1000
        %v1002 = vpop.f32.mrf.mxu0
        %v1003 = vadd.f32 %v926, %v1002
        %1004 = vmatmul.bf16.gmra.mxu0 %v904
        %v1005 = vpop.f32.mrf.mxu0
        %v1006 = vadd.f32 %v926, %v1005
        %v1007 = vpop.f32.mrf.mxu0
        %v1008 = vadd.f32 %v926, %v1007
        %1009 = vmatmul.bf16.gmra.mxu0 %v905
        %v1010 = vpop.f32.mrf.mxu0
        %v1011 = vadd.f32 %v926, %v1010
        %v1012 = vpop.f32.mrf.mxu0
        %v1013 = vadd.f32 %v926, %v1012
        %1014 = vmatmul.bf16.gmra.mxu0 %v906
        %v1015 = vpop.f32.mrf.mxu0
        %v1016 = vadd.f32 %v926, %v1015
        %v1017 = vpop.f32.mrf.mxu0
        %v1018 = vadd.f32 %v926, %v1017
        %1019 = vmatmul.bf16.gmra.mxu0 %v907
        %v1020 = vpop.f32.mrf.mxu0
        %v1021 = vadd.f32 %v926, %v1020
        %v1022 = vpop.f32.mrf.mxu0
        %v1023 = vadd.f32 %v926, %v1022
        %1024 = vdwg.mxu0
        %1025 = vst [vmem:[%s418] sm:$0xff] %v986
        %1026 = vst [vmem:[%s418 + $0x8] sm:$0xff] %v988
        %1027 = vst [vmem:[%s418 + $0x10] sm:$0xff] %v991
        %1028 = vst [vmem:[%s418 + $0x18] sm:$0xff] %v993
        %1029 = vst [vmem:[%s418 + $0x20] sm:$0xff] %v996
        %1030 = vst [vmem:[%s418 + $0x28] sm:$0xff] %v998
        %1031 = vst [vmem:[%s418 + $0x30] sm:$0xff] %v1001
        %1032 = vst [vmem:[%s418 + $0x38] sm:$0xff] %v1003
        %1033 = vst [vmem:[%s418 + $0x40] sm:$0xff] %v1006
        %1034 = vst [vmem:[%s418 + $0x48] sm:$0xff] %v1008
        %1035 = vst [vmem:[%s418 + $0x50] sm:$0xff] %v1011
        %1036 = vst [vmem:[%s418 + $0x58] sm:$0xff] %v1013
        %1037 = vst [vmem:[%s418 + $0x60] sm:$0xff] %v1016
        %1038 = vst [vmem:[%s418 + $0x68] sm:$0xff] %v1018
        %1039 = vst [vmem:[%s418 + $0x70] sm:$0xff] %v1021
        %1040 = vst [vmem:[%s418 + $0x78] sm:$0xff] %v1023
        %s1041 = sand.u32 %s230, 1
        %s1042 = scalar_lea.sflag [#allocation4], %s1041
        %s1043 = sand.u32 %s230, 1
        %s1044 = smul.addr %s1043, 128
        %s1045 = scalar_lea.vmem [#allocation11], %s1044
        // Predicated region
        $region77: #{tpu_custom_call.1} parent=55 // pred_check
          %p1046 = pneg %p240
        $region78: #{tpu_custom_call.1} parent=55 // pred_check_branch
          %1048 = sbr.rel (%p1046) target = $region80
        $region79: #{tpu_custom_call.1} parent=55 // pred_region
          %s1049 = smul.u32 16, %s28
          %1051 = vsyncadd %s1042, 0
          %s1052 = smul.addr %s1049, 8
          %s1053 = scalar_lea.hbm %s9, %s1052
          %s1054 = sshll.u32 %s1045, 4
          %s1055 = int_to_ptr.vmem [resolvable:$true] %s1054
          %s1056 = sshll.u32 %s1053, 4
          %s1057 = int_to_ptr.hbm [resolvable:$true] %s1056
          %1062 = dma.vmem_to_hbm [thread:$0]  %s1055, 2048, %s1057, %s1042, 128, 128, 8
        $region80: #{tpu_custom_call.1} parent=55 // pred_fallthru
          _
      $region56: #{tpu_custom_call.1} parent=5 // pred_fallthru
        _
      %p1063 = scmp.le.s32.totalorder 2, %s23
      // Predicated region
      $region81: #{tpu_custom_call.1} parent=5 // pred_check
        %p1064 = pneg %p1063
      $region82: #{tpu_custom_call.1} parent=5 // pred_check_branch
        %1066 = sbr.rel (%p1064) target = $region84
      $region83: #{tpu_custom_call.1} parent=5 // pred_region
        %s1067 = ssub.s32 %s23, 2
        // Predicated region
        $region85: #{tpu_custom_call.1} parent=83 // pred_check
          %p1068 = pneg %p246
        $region86: #{tpu_custom_call.1} parent=83 // pred_check_branch
          %1070 = sbr.rel (%p1068) target = $region88
        $region87: #{tpu_custom_call.1} parent=83 // pred_region
          %s1071 = sand.u32 %s231, 1
          %s1072 = scalar_lea.sflag [#allocation4], %s1071
          %s1073 = sand.u32 %s231, 1
          %s1074 = smul.addr %s1073, 128
          %s1075 = scalar_lea.vmem [#allocation11], %s1074
          %1077 = dma.done %s1072, 2048
        $region88: #{tpu_custom_call.1} parent=83 // pred_fallthru
          _
      $region84: #{tpu_custom_call.1} parent=5 // pred_fallthru
        _
    $region6: #{tpu_custom_call.1} parent=1 // loop_footer
      %s27 = sadd.s32 1, %s23
    $region7: #{tpu_custom_call.1} parent=1 // loop_footer_branch
      %22 = sbr.rel target = $region3
    $region8: #{tpu_custom_call.1} parent=1 // loop_exit
      _
    %1078 = vsyncpa [#allocation3], 1
    %s1079 = scalar_lea.sflag [#allocation3], 1
    %1080 = vsyncpa %s1079, 1
    %1081 = vsyncpa [#allocation6], 1
    %1082 = vsyncpa [#allocation9], 1
    %1083 = vsyncpa [#allocation4], 1
    %s1084 = scalar_lea.sflag [#allocation4], 1
    %1085 = vsyncpa %s1084, 1

// kernel: tpu_custom_call.1
$region0: #{tpu_custom_call.1}
  #allocation0 [shape = 'u32[]', space=smem, size = 0x4, offset = 0x4, fixed_abs, tag = 'smem constant byte address 0x4 - core index']
  #allocation1 [shape = 'u32[72,128]{1,0:T(1,128)}', space=vmem, size = 0x9000, scoped, tag = 'internal scratch']
  %s0 = inlined_call_operand.hbm [shape: bf16[256,128], index: 0, kind: input, shape index: {}]
  %s1 = inlined_call_operand.hbm [shape: bf16[128,128], index: 1, kind: input, shape index: {}]
  %s2 = inlined_call_operand.vmem [shape: f32[1,128], index: 2, kind: input, shape index: {}]
  %s3 = inlined_call_operand.hbm [shape: bf16[128,128], index: 3, kind: input, shape index: {}]
  %s4 = inlined_call_operand.vmem [shape: f32[1,128], index: 4, kind: input, shape index: {}]
  %s5 = inlined_call_operand.hbm [shape: bf16[128,128], index: 5, kind: input, shape index: {}]
  %s6 = inlined_call_operand.vmem [shape: f32[1,128], index: 6, kind: input, shape index: {}]
  %s7 = inlined_call_operand.hbm [shape: bf16[128,128], index: 7, kind: input, shape index: {}]
  %s8 = inlined_call_operand.vmem [shape: f32[1,128], index: 8, kind: input, shape index: {}]
  %s9 = inlined_call_operand.hbm [shape: f32[256,128], index: 9, kind: output, shape index: {}]
  %s10 = sld [smem:[#allocation0]]
  $region89: #{tpu_custom_call.1} parent=0
    _
  %s12 = ssub.s32 1, %s10
  %s13 = scalar_select 0, %s12, %s10
  $region1: #{tpu_custom_call.1} parent=0
    #allocation2 [shape = 'u8[65536]{0}', space=vmem, size = 0x10000, scoped, tag = 'input window, operand 0']
    #allocation3 [shape = 's32[2]{0}', space=sflag, size = 0x8, scoped, tag = 'scoped memory for tpu_custom_call.1']
    #allocation4 [shape = 's32[2]{0}', space=sflag, size = 0x8, scoped, tag = 'scoped memory for tpu_custom_call.1']
    #allocation5 [shape = 'u8[32768]{0}', space=vmem, size = 0x8000, scoped, tag = 'input window, operand 1, single buffered']
    #allocation6 [shape = 's32[1]{0}', space=sflag, size = 0x4, scoped, tag = 'scoped memory for tpu_custom_call.1']
    #allocation7 [shape = 'u8[32768]{0}', space=vmem, size = 0x8000, scoped, tag = 'input window, operand 3, single buffered']
    #allocation8 [shape = 'u8[32768]{0}', space=vmem, size = 0x8000, scoped, tag = 'input window, operand 5, single buffered']
    #allocation9 [shape = 's32[1]{0}', space=sflag, size = 0x4, scoped, tag = 'scoped memory for tpu_custom_call.1']
    #allocation10 [shape = 'u8[32768]{0}', space=vmem, size = 0x8000, scoped, tag = 'input window, operand 7, single buffered']
    #allocation11 [shape = 'u8[131072]{0}', space=vmem, size = 0x20000, scoped, tag = 'output window, operand 0']
    %14 = vsyncpa [#allocation3], 0
    %s15 = scalar_lea.sflag [#allocation3], 1
    %16 = vsyncpa %s15, 0
    %17 = vsyncpa [#allocation6], 0
    %18 = vsyncpa [#allocation9], 0
    %19 = vsyncpa [#allocation4], 0
    %s20 = scalar_lea.sflag [#allocation4], 1
    %21 = vsyncpa %s20, 0
    loop: start=0, step=1, limit=4
    $region2: #{tpu_custom_call.1} parent=1 // loop_pre_header
      _
    $region3: #{tpu_custom_call.1} parent=1 // loop_header
      %s23 = sphi 0, %s27
      %p24 = scmp.ge.s32.totalorder %s23, 4
      %s33 = sphi 0, %s35
      %s36 = sphi 0, %s33
      %s37 = sphi 0, %s36
      %s53 = sphi 0, %s37
      %s57 = sphi 0, %s57
      %s59 = sphi 0, %s57
      %s60 = sphi 0, %s59
      %s74 = sphi 0, %s60
      %s78 = sphi 0, %s78
      %s80 = sphi 0, %s78
      %s81 = sphi 0, %s80
      %s95 = sphi 0, %s81
      %s99 = sphi 0, %s99
      %s101 = sphi 0, %s99
      %s102 = sphi 0, %s101
      %s116 = sphi 0, %s102
      %s120 = sphi 0, %s120
      %s122 = sphi 0, %s120
      %s123 = sphi 0, %s122
      %s137 = sphi 0, %s123
      %s141 = sphi 0, %s141
      %s143 = sphi 0, %s141
      %s144 = sphi 0, %s143
      %s158 = sphi 0, %s144
      %s162 = sphi 0, %s162
      %s164 = sphi 0, %s162
      %s165 = sphi 0, %s164
      %s179 = sphi 0, %s165
      %s183 = sphi 0, %s183
      %s185 = sphi 0, %s183
      %s186 = sphi 0, %s185
      %s200 = sphi 0, %s186
      %s204 = sphi 0, %s204
      %s206 = sphi 0, %s204
      %s207 = sphi 0, %s206
      %s221 = sphi 0, %s207
      %s227 = sphi 0, %s229
      %s230 = sphi 0, %s227
      %s231 = sphi 0, %s230
      %s247 = sphi 0, %s231
    $region4: #{tpu_custom_call.1} parent=1 // loop_header_branch
      %26 = sbr.rel (%p24) target = $region8
    $region5: #{tpu_custom_call.1} parent=1 // loop_body
      %s28 = ssub.s32 %s23, 1
      %s29 = ssub.s32 %s23, 2
      %s30 = sadd.s32 %s23, 1
      %s31 = ssub.s32 %s23, %s30
      %p32 = scmp.eq.s32.totalorder %s31, 0
      %s34 = sadd.s32 %s33, 1
      %s35 = scalar_select %p32, %s33, %s34
      %p38 = pneg %p32
      %p39 = scmp.eq.s32.totalorder %s23, 1
      %p40 = por %p38, %p39
      %p41 = scmp.ne.s32.totalorder %s33, %s36
      %p42 = scmp.eq.s32.totalorder %s23, 0
      %p43 = por %p41, %p42
      %p44 = scmp.ne.s32.totalorder %s33, %s36
      %p45 = scmp.eq.s32.totalorder %s28, 1
      %p46 = por %p44, %p45
      %p47 = scmp.ne.s32.totalorder %s36, %s37
      %p48 = scmp.eq.s32.totalorder %s28, 0
      %p49 = por %p47, %p48
      %p50 = scmp.ne.s32.totalorder %s36, %s37
      %p51 = scmp.eq.s32.totalorder %s29, 1
      %p52 = por %p50, %p51
      %p54 = scmp.ne.s32.totalorder %s37, %s53
      %p55 = scmp.eq.s32.totalorder %s29, 0
      %p56 = por %p54, %p55
      %s58 = sadd.s32 %s57, 1
      %p61 = scmp.eq.s32.totalorder %s23, 1
      %p62 = scmp.ne.s32.totalorder %s57, %s59
      %p63 = scmp.eq.s32.totalorder %s23, 0
      %p64 = por %p62, %p63
      %p65 = scmp.ne.s32.totalorder %s57, %s59
      %p66 = scmp.eq.s32.totalorder %s28, 1
      %p67 = por %p65, %p66
      %p68 = scmp.ne.s32.totalorder %s59, %s60
      %p69 = scmp.eq.s32.totalorder %s28, 0
      %p70 = por %p68, %p69
      %p71 = scmp.ne.s32.totalorder %s59, %s60
      %p72 = scmp.eq.s32.totalorder %s29, 1
      %p73 = por %p71, %p72
      %p75 = scmp.ne.s32.totalorder %s60, %s74
      %p76 = scmp.eq.s32.totalorder %s29, 0
      %p77 = por %p75, %p76
      %s79 = sadd.s32 %s78, 1
      %p82 = scmp.eq.s32.totalorder %s23, 1
      %p83 = scmp.ne.s32.totalorder %s78, %s80
      %p84 = scmp.eq.s32.totalorder %s23, 0
      %p85 = por %p83, %p84
      %p86 = scmp.ne.s32.totalorder %s78, %s80
      %p87 = scmp.eq.s32.totalorder %s28, 1
      %p88 = por %p86, %p87
      %p89 = scmp.ne.s32.totalorder %s80, %s81
      %p90 = scmp.eq.s32.totalorder %s28, 0
      %p91 = por %p89, %p90
      %p92 = scmp.ne.s32.totalorder %s80, %s81
      %p93 = scmp.eq.s32.totalorder %s29, 1
      %p94 = por %p92, %p93
      %p96 = scmp.ne.s32.totalorder %s81, %s95
      %p97 = scmp.eq.s32.totalorder %s29, 0
      %p98 = por %p96, %p97
      %s100 = sadd.s32 %s99, 1
      %p103 = scmp.eq.s32.totalorder %s23, 1
      %p104 = scmp.ne.s32.totalorder %s99, %s101
      %p105 = scmp.eq.s32.totalorder %s23, 0
      %p106 = por %p104, %p105
      %p107 = scmp.ne.s32.totalorder %s99, %s101
      %p108 = scmp.eq.s32.totalorder %s28, 1
      %p109 = por %p107, %p108
      %p110 = scmp.ne.s32.totalorder %s101, %s102
      %p111 = scmp.eq.s32.totalorder %s28, 0
      %p112 = por %p110, %p111
      %p113 = scmp.ne.s32.totalorder %s101, %s102
      %p114 = scmp.eq.s32.totalorder %s29, 1
      %p115 = por %p113, %p114
      %p117 = scmp.ne.s32.totalorder %s102, %s116
      %p118 = scmp.eq.s32.totalorder %s29, 0
      %p119 = por %p117, %p118
      %s121 = sadd.s32 %s120, 1
      %p124 = scmp.eq.s32.totalorder %s23, 1
      %p125 = scmp.ne.s32.totalorder %s120, %s122
      %p126 = scmp.eq.s32.totalorder %s23, 0
      %p127 = por %p125, %p126
      %p128 = scmp.ne.s32.totalorder %s120, %s122
      %p129 = scmp.eq.s32.totalorder %s28, 1
      %p130 = por %p128, %p129
      %p131 = scmp.ne.s32.totalorder %s122, %s123
      %p132 = scmp.eq.s32.totalorder %s28, 0
      %p133 = por %p131, %p132
      %p134 = scmp.ne.s32.totalorder %s122, %s123
      %p135 = scmp.eq.s32.totalorder %s29, 1
      %p136 = por %p134, %p135
      %p138 = scmp.ne.s32.totalorder %s123, %s137
      %p139 = scmp.eq.s32.totalorder %s29, 0
      %p140 = por %p138, %p139
      %s142 = sadd.s32 %s141, 1
      %p145 = scmp.eq.s32.totalorder %s23, 1
      %p146 = scmp.ne.s32.totalorder %s141, %s143
      %p147 = scmp.eq.s32.totalorder %s23, 0
      %p148 = por %p146, %p147
      %p149 = scmp.ne.s32.totalorder %s141, %s143
      %p150 = scmp.eq.s32.totalorder %s28, 1
      %p151 = por %p149, %p150
      %p152 = scmp.ne.s32.totalorder %s143, %s144
      %p153 = scmp.eq.s32.totalorder %s28, 0
      %p154 = por %p152, %p153
      %p155 = scmp.ne.s32.totalorder %s143, %s144
      %p156 = scmp.eq.s32.totalorder %s29, 1
      %p157 = por %p155, %p156
      %p159 = scmp.ne.s32.totalorder %s144, %s158
      %p160 = scmp.eq.s32.totalorder %s29, 0
      %p161 = por %p159, %p160
      %s163 = sadd.s32 %s162, 1
      %p166 = scmp.eq.s32.totalorder %s23, 1
      %p167 = scmp.ne.s32.totalorder %s162, %s164
      %p168 = scmp.eq.s32.totalorder %s23, 0
      %p169 = por %p167, %p168
      %p170 = scmp.ne.s32.totalorder %s162, %s164
      %p171 = scmp.eq.s32.totalorder %s28, 1
      %p172 = por %p170, %p171
      %p173 = scmp.ne.s32.totalorder %s164, %s165
      %p174 = scmp.eq.s32.totalorder %s28, 0
      %p175 = por %p173, %p174
      %p176 = scmp.ne.s32.totalorder %s164, %s165
      %p177 = scmp.eq.s32.totalorder %s29, 1
      %p178 = por %p176, %p177
      %p180 = scmp.ne.s32.totalorder %s165, %s179
      %p181 = scmp.eq.s32.totalorder %s29, 0
      %p182 = por %p180, %p181
      %s184 = sadd.s32 %s183, 1
      %p187 = scmp.eq.s32.totalorder %s23, 1
      %p188 = scmp.ne.s32.totalorder %s183, %s185
      %p189 = scmp.eq.s32.totalorder %s23, 0
      %p190 = por %p188, %p189
      %p191 = scmp.ne.s32.totalorder %s183, %s185
      %p192 = scmp.eq.s32.totalorder %s28, 1
      %p193 = por %p191, %p192
      %p194 = scmp.ne.s32.totalorder %s185, %s186
      %p195 = scmp.eq.s32.totalorder %s28, 0
      %p196 = por %p194, %p195
      %p197 = scmp.ne.s32.totalorder %s185, %s186
      %p198 = scmp.eq.s32.totalorder %s29, 1
      %p199 = por %p197, %p198
      %p201 = scmp.ne.s32.totalorder %s186, %s200
      %p202 = scmp.eq.s32.totalorder %s29, 0
      %p203 = por %p201, %p202
      %s205 = sadd.s32 %s204, 1
      %p208 = scmp.eq.s32.totalorder %s23, 1
      %p209 = scmp.ne.s32.totalorder %s204, %s206
      %p210 = scmp.eq.s32.totalorder %s23, 0
      %p211 = por %p209, %p210
      %p212 = scmp.ne.s32.totalorder %s204, %s206
      %p213 = scmp.eq.s32.totalorder %s28, 1
      %p214 = por %p212, %p213
      %p215 = scmp.ne.s32.totalorder %s206, %s207
      %p216 = scmp.eq.s32.totalorder %s28, 0
      %p217 = por %p215, %p216
      %p218 = scmp.ne.s32.totalorder %s206, %s207
      %p219 = scmp.eq.s32.totalorder %s29, 1
      %p220 = por %p218, %p219
      %p222 = scmp.ne.s32.totalorder %s207, %s221
      %p223 = scmp.eq.s32.totalorder %s29, 0
      %p224 = por %p222, %p223
      %s225 = ssub.s32 %s23, %s30
      %p226 = scmp.eq.s32.totalorder %s225, 0
      %s228 = sadd.s32 %s227, 1
      %s229 = scalar_select %p226, %s227, %s228
      %p232 = pneg %p226
      %p233 = scmp.eq.s32.totalorder %s23, 1
      %p234 = por %p232, %p233
      %p235 = scmp.ne.s32.totalorder %s227, %s230
      %p236 = scmp.eq.s32.totalorder %s23, 0
      %p237 = por %p235, %p236
      %p238 = scmp.ne.s32.totalorder %s227, %s230
      %p239 = scmp.eq.s32.totalorder %s28, 1
      %p240 = por %p238, %p239
      %p241 = scmp.ne.s32.totalorder %s230, %s231
      %p242 = scmp.eq.s32.totalorder %s28, 0
      %p243 = por %p241, %p242
      %p244 = scmp.ne.s32.totalorder %s230, %s231
      %p245 = scmp.eq.s32.totalorder %s29, 1
      %p246 = por %p244, %p245
      %p248 = scmp.ne.s32.totalorder %s231, %s247
      %p249 = scmp.eq.s32.totalorder %s29, 0
      %p250 = por %p248, %p249
      %p251 = scmp.le.s32.totalorder 1, %s23
      %p252 = scmp.lt.s32.totalorder %s23, 3
      %p253 = pnand %p251, %p252
      %p254 = pneg %p253
      // Predicated region
      $region9: #{tpu_custom_call.1} parent=5 // pred_check
        _
      $region10: #{tpu_custom_call.1} parent=5 // pred_check_branch
        %256 = sbr.rel (%p253) target = $region12
      $region11: #{tpu_custom_call.1} parent=5 // pred_region
        %s257 = ssub.s32 %s23, 1
        // Predicated region
        $region13: #{tpu_custom_call.1} parent=11 // pred_check
          %p258 = pneg %p70
        $region14: #{tpu_custom_call.1} parent=11 // pred_check_branch
          %260 = sbr.rel (%p258) target = $region16
        $region15: #{tpu_custom_call.1} parent=11 // pred_region
          %262 = vsyncadd [#allocation6], 0
          %s263 = sshll.u32 %s1, 4
          %s264 = int_to_ptr.hbm [resolvable:$true] %s263
          %s265 = sshll.u32 [#allocation5], 4
          %s266 = int_to_ptr.vmem [resolvable:$true] %s265
          %271 = dma.hbm_to_vmem [thread:$0]  %s264, 1024, %s266, [#allocation6], 64, 64, 4
        $region16: #{tpu_custom_call.1} parent=11 // pred_fallthru
          _
        // Predicated region
        $region17: #{tpu_custom_call.1} parent=11 // pred_check
          %p272 = pneg %p91
        $region18: #{tpu_custom_call.1} parent=11 // pred_check_branch
          %274 = sbr.rel (%p272) target = $region20
        $region19: #{tpu_custom_call.1} parent=11 // pred_region
          _
        $region20: #{tpu_custom_call.1} parent=11 // pred_fallthru
          _
        // Predicated region
        $region21: #{tpu_custom_call.1} parent=11 // pred_check
          %p275 = pneg %p112
        $region22: #{tpu_custom_call.1} parent=11 // pred_check_branch
          %277 = sbr.rel (%p275) target = $region24
        $region23: #{tpu_custom_call.1} parent=11 // pred_region
          %279 = vsyncadd [#allocation6], 0
          %s280 = sshll.u32 %s3, 4
          %s281 = int_to_ptr.hbm [resolvable:$true] %s280
          %s282 = sshll.u32 [#allocation7], 4
          %s283 = int_to_ptr.vmem [resolvable:$true] %s282
          %288 = dma.hbm_to_vmem [thread:$0]  %s281, 1024, %s283, [#allocation6], 64, 64, 4
        $region24: #{tpu_custom_call.1} parent=11 // pred_fallthru
          _
        // Predicated region
        $region25: #{tpu_custom_call.1} parent=11 // pred_check
          %p289 = pneg %p133
        $region26: #{tpu_custom_call.1} parent=11 // pred_check_branch
          %291 = sbr.rel (%p289) target = $region28
        $region27: #{tpu_custom_call.1} parent=11 // pred_region
          _
        $region28: #{tpu_custom_call.1} parent=11 // pred_fallthru
          _
        // Predicated region
        $region29: #{tpu_custom_call.1} parent=11 // pred_check
          %p292 = pneg %p154
        $region30: #{tpu_custom_call.1} parent=11 // pred_check_branch
          %294 = sbr.rel (%p292) target = $region32
        $region31: #{tpu_custom_call.1} parent=11 // pred_region
          %296 = vsyncadd [#allocation9], 0
          %s297 = sshll.u32 %s5, 4
          %s298 = int_to_ptr.hbm [resolvable:$true] %s297
          %s299 = sshll.u32 [#allocation8], 4
          %s300 = int_to_ptr.vmem [resolvable:$true] %s299
          %305 = dma.hbm_to_vmem [thread:$0]  %s298, 1024, %s300, [#allocation9], 64, 64, 4
        $region32: #{tpu_custom_call.1} parent=11 // pred_fallthru
          _
        // Predicated region
        $region33: #{tpu_custom_call.1} parent=11 // pred_check
          %p306 = pneg %p175
        $region34: #{tpu_custom_call.1} parent=11 // pred_check_branch
          %308 = sbr.rel (%p306) target = $region36
        $region35: #{tpu_custom_call.1} parent=11 // pred_region
          _
        $region36: #{tpu_custom_call.1} parent=11 // pred_fallthru
          _
        // Predicated region
        $region37: #{tpu_custom_call.1} parent=11 // pred_check
          %p309 = pneg %p196
        $region38: #{tpu_custom_call.1} parent=11 // pred_check_branch
          %311 = sbr.rel (%p309) target = $region40
        $region39: #{tpu_custom_call.1} parent=11 // pred_region
          %313 = vsyncadd [#allocation9], 0
          %s314 = sshll.u32 %s7, 4
          %s315 = int_to_ptr.hbm [resolvable:$true] %s314
          %s316 = sshll.u32 [#allocation10], 4
          %s317 = int_to_ptr.vmem [resolvable:$true] %s316
          %322 = dma.hbm_to_vmem [thread:$0]  %s315, 1024, %s317, [#allocation9], 64, 64, 4
        $region40: #{tpu_custom_call.1} parent=11 // pred_fallthru
          _
        // Predicated region
        $region41: #{tpu_custom_call.1} parent=11 // pred_check
          %p323 = pneg %p217
        $region42: #{tpu_custom_call.1} parent=11 // pred_check_branch
          %325 = sbr.rel (%p323) target = $region44
        $region43: #{tpu_custom_call.1} parent=11 // pred_region
          _
        $region44: #{tpu_custom_call.1} parent=11 // pred_fallthru
          _
      $region12: #{tpu_custom_call.1} parent=5 // pred_fallthru
        _
      %p326 = scmp.lt.s32.totalorder %s23, 2
      // Predicated region
      $region45: #{tpu_custom_call.1} parent=5 // pred_check
        %p327 = pneg %p326
      $region46: #{tpu_custom_call.1} parent=5 // pred_check_branch
        %329 = sbr.rel (%p327) target = $region48
      $region47: #{tpu_custom_call.1} parent=5 // pred_region
        // Predicated region
        $region49: #{tpu_custom_call.1} parent=47 // pred_check
          %p330 = pneg %p43
        $region50: #{tpu_custom_call.1} parent=47 // pred_check_branch
          %332 = sbr.rel (%p330) target = $region52
        $region51: #{tpu_custom_call.1} parent=47 // pred_region
          %s333 = sand.u32 %s33, 1
          %s334 = scalar_lea.sflag [#allocation3], %s333
          %s335 = sand.u32 %s33, 1
          %s336 = smul.addr %s335, 64
          %s337 = scalar_lea.vmem [#allocation2], %s336
          %s338 = smul.u32 16, %s23
          %340 = vsyncadd %s334, 0
          %s341 = smul.addr %s338, 4
          %s342 = scalar_lea.hbm %s0, %s341
          %s343 = sshll.u32 %s342, 4
          %s344 = int_to_ptr.hbm [resolvable:$true] %s343
          %s345 = sshll.u32 %s337, 4
          %s346 = int_to_ptr.vmem [resolvable:$true] %s345
          %351 = dma.hbm_to_vmem [thread:$0]  %s344, 1024, %s346, %s334, 64, 64, 4
        $region52: #{tpu_custom_call.1} parent=47 // pred_fallthru
          _
      $region48: #{tpu_custom_call.1} parent=5 // pred_fallthru
        _
      %p352 = scmp.le.s32.totalorder 1, %s23
      %p353 = scmp.lt.s32.totalorder %s23, 3
      %p354 = pnand %p352, %p353
      %p355 = pneg %p354
      // Predicated region
      $region53: #{tpu_custom_call.1} parent=5 // pred_check
        _
      $region54: #{tpu_custom_call.1} parent=5 // pred_check_branch
        %357 = sbr.rel (%p354) target = $region56
      $region55: #{tpu_custom_call.1} parent=5 // pred_region
        %s358 = ssub.s32 %s23, 1
        %s359 = sand.u32 %s36, 1
        %s360 = scalar_lea.sflag [#allocation3], %s359
        %s361 = sand.u32 %s36, 1
        %s362 = smul.addr %s361, 64
        %s363 = scalar_lea.vmem [#allocation2], %s362
        // Predicated region
        $region57: #{tpu_custom_call.1} parent=55 // pred_check
          %p364 = pneg %p49
        $region58: #{tpu_custom_call.1} parent=55 // pred_check_branch
          %366 = sbr.rel (%p364) target = $region60
        $region59: #{tpu_custom_call.1} parent=55 // pred_region
          %368 = dma.done %s360, 1024
        $region60: #{tpu_custom_call.1} parent=55 // pred_fallthru
          _
        // Predicated region
        $region61: #{tpu_custom_call.1} parent=55 // pred_check
          %p369 = pneg %p70
        $region62: #{tpu_custom_call.1} parent=55 // pred_check_branch
          %371 = sbr.rel (%p369) target = $region64
        $region63: #{tpu_custom_call.1} parent=55 // pred_region
          %373 = dma.done [#allocation6], 1024
        $region64: #{tpu_custom_call.1} parent=55 // pred_fallthru
          _
        // Predicated region
        $region65: #{tpu_custom_call.1} parent=55 // pred_check
          %p374 = pneg %p112
        $region66: #{tpu_custom_call.1} parent=55 // pred_check_branch
          %376 = sbr.rel (%p374) target = $region68
        $region67: #{tpu_custom_call.1} parent=55 // pred_region
          %378 = dma.done [#allocation6], 1024
        $region68: #{tpu_custom_call.1} parent=55 // pred_fallthru
          _
        // Predicated region
        $region69: #{tpu_custom_call.1} parent=55 // pred_check
          %p379 = pneg %p154
        $region70: #{tpu_custom_call.1} parent=55 // pred_check_branch
          %381 = sbr.rel (%p379) target = $region72
        $region71: #{tpu_custom_call.1} parent=55 // pred_region
          %383 = dma.done [#allocation9], 1024
        $region72: #{tpu_custom_call.1} parent=55 // pred_fallthru
          _
        // Predicated region
        $region73: #{tpu_custom_call.1} parent=55 // pred_check
          %p384 = pneg %p196
        $region74: #{tpu_custom_call.1} parent=55 // pred_check_branch
          %386 = sbr.rel (%p384) target = $region76
        $region75: #{tpu_custom_call.1} parent=55 // pred_region
          %388 = dma.done [#allocation9], 1024
        $region76: #{tpu_custom_call.1} parent=55 // pred_fallthru
          _
        %s389 = sand.u32 %s36, 1
        %s390 = scalar_lea.sflag [#allocation3], %s389
        %s391 = sand.u32 %s36, 1
        %s392 = smul.addr %s391, 64
        %s393 = scalar_lea.vmem [#allocation2], %s392
        %p394 = pneg %p49
        %p395 = pneg %p46
        %p396 = pneg %p70
        %p397 = pneg %p67
        %p398 = pneg %p91
        %p399 = pneg %p88
        %p400 = pneg %p112
        %p401 = pneg %p109
        %p402 = pneg %p133
        %p403 = pneg %p130
        %p404 = pneg %p154
        %p405 = pneg %p151
        %p406 = pneg %p175
        %p407 = pneg %p172
        %p408 = pneg %p196
        %p409 = pneg %p193
        %p410 = pneg %p217
        %p411 = pneg %p214
        %p412 = pneg %p243
        %p413 = pneg %p240
        %s414 = sand.u32 %s230, 1
        %s415 = scalar_lea.sflag [#allocation4], %s414
        %s416 = sand.u32 %s230, 1
        %s417 = smul.addr %s416, 128
        %s418 = scalar_lea.vmem [#allocation11], %s417
        %s419 = smul.u32 16, %s28
        %s420 = smul.u32 16, %s28
        %v421 = vld [vmem:[%s363] sm:$0xf]
        %v422 = vld [vmem:[%s363 + $0x4] sm:$0xf]
        %v423 = vld [vmem:[%s363 + $0x8] sm:$0xf]
        %v424 = vld [vmem:[%s363 + $0xc] sm:$0xf]
        %v425 = vld [vmem:[%s363 + $0x10] sm:$0xf]
        %v426 = vld [vmem:[%s363 + $0x14] sm:$0xf]
        %v427 = vld [vmem:[%s363 + $0x18] sm:$0xf]
        %v428 = vld [vmem:[%s363 + $0x1c] sm:$0xf]
        %v429 = vld [vmem:[%s363 + $0x20] sm:$0xf]
        %v430 = vld [vmem:[%s363 + $0x24] sm:$0xf]
        %v431 = vld [vmem:[%s363 + $0x28] sm:$0xf]
        %v432 = vld [vmem:[%s363 + $0x2c] sm:$0xf]
        %v433 = vld [vmem:[%s363 + $0x30] sm:$0xf]
        %v434 = vld [vmem:[%s363 + $0x34] sm:$0xf]
        %v435 = vld [vmem:[%s363 + $0x38] sm:$0xf]
        %v436 = vld [vmem:[%s363 + $0x3c] sm:$0xf]
        %v437 = vld [vmem:[#allocation5] sm:$0xf]
        %v438 = vld [vmem:[#allocation5 + $0x4] sm:$0xf]
        %v439 = vld [vmem:[#allocation5 + $0x8] sm:$0xf]
        %v440 = vld [vmem:[#allocation5 + $0xc] sm:$0xf]
        %v441 = vld [vmem:[#allocation5 + $0x10] sm:$0xf]
        %v442 = vld [vmem:[#allocation5 + $0x14] sm:$0xf]
        %v443 = vld [vmem:[#allocation5 + $0x18] sm:$0xf]
        %v444 = vld [vmem:[#allocation5 + $0x1c] sm:$0xf]
        %v445 = vld [vmem:[#allocation5 + $0x20] sm:$0xf]
        %v446 = vld [vmem:[#allocation5 + $0x24] sm:$0xf]
        %v447 = vld [vmem:[#allocation5 + $0x28] sm:$0xf]
        %v448 = vld [vmem:[#allocation5 + $0x2c] sm:$0xf]
        %v449 = vld [vmem:[#allocation5 + $0x30] sm:$0xf]
        %v450 = vld [vmem:[#allocation5 + $0x34] sm:$0xf]
        %v451 = vld [vmem:[#allocation5 + $0x38] sm:$0xf]
        %v452 = vld [vmem:[#allocation5 + $0x3c] sm:$0xf]
        %v453 = vld [vmem:[%s2] sm:$0x1]
        %v455 = vperm.slane %v453, 0
        %v473 = vunpack.c.l.b16 %v421
        %v474 = vunpack.c.l.b16 %v422
        %v475 = vunpack.c.l.b16 %v423
        %v476 = vunpack.c.l.b16 %v424
        %v477 = vunpack.c.l.b16 %v425
        %v478 = vunpack.c.l.b16 %v426
        %v479 = vunpack.c.l.b16 %v427
        %v480 = vunpack.c.l.b16 %v428
        %v481 = vunpack.c.l.b16 %v429
        %v482 = vunpack.c.l.b16 %v430
        %v483 = vunpack.c.l.b16 %v431
        %v484 = vunpack.c.l.b16 %v432
        %v485 = vunpack.c.l.b16 %v433
        %v486 = vunpack.c.l.b16 %v434
        %v487 = vunpack.c.l.b16 %v435
        %v488 = vunpack.c.l.b16 %v436
        %v489 = vpack.c.b16 %v474, %v473
        %v490 = vpack.c.b16 %v476, %v475
        %v491 = vpack.c.b16 %v478, %v477
        %v492 = vpack.c.b16 %v480, %v479
        %v493 = vpack.c.b16 %v482, %v481
        %v494 = vpack.c.b16 %v484, %v483
        %v495 = vpack.c.b16 %v486, %v485
        %v496 = vpack.c.b16 %v488, %v487
        %v521 = vunpack.c.l.b16 %v437
        %v522 = vunpack.c.l.b16 %v438
        %v523 = vunpack.c.l.b16 %v439
        %v524 = vunpack.c.l.b16 %v440
        %v525 = vunpack.c.l.b16 %v441
        %v526 = vunpack.c.l.b16 %v442
        %v527 = vunpack.c.l.b16 %v443
        %v528 = vunpack.c.l.b16 %v444
        %v529 = vunpack.c.l.b16 %v445
        %v530 = vunpack.c.l.b16 %v446
        %v531 = vunpack.c.l.b16 %v447
        %v532 = vunpack.c.l.b16 %v448
        %v533 = vunpack.c.l.b16 %v449
        %v534 = vunpack.c.l.b16 %v450
        %v535 = vunpack.c.l.b16 %v451
        %v536 = vunpack.c.l.b16 %v452
        %v537 = vpack.c.b16 %v522, %v521
        %v538 = vpack.c.b16 %v524, %v523
        %v539 = vpack.c.b16 %v526, %v525
        %v540 = vpack.c.b16 %v528, %v527
        %v541 = vpack.c.b16 %v530, %v529
        %v542 = vpack.c.b16 %v532, %v531
        %v543 = vpack.c.b16 %v534, %v533
        %v544 = vpack.c.b16 %v536, %v535
        %553 = vmatpush.bf16.msra.mxu0 %v544
        %554 = vmatpush.bf16.msra.mxu0 %v543
        %555 = vmatpush.bf16.msra.mxu0 %v542
        %556 = vmatpush.bf16.msra.mxu0 %v541
        %557 = vmatpush.bf16.msra.mxu0 %v540
        %558 = vmatpush.bf16.msra.mxu0 %v539
        %559 = vmatpush.bf16.msra.mxu0 %v538
        %560 = vmatpush.bf16.msra.mxu0 %v537
        %561 = vmatmul.bf16.gmra.mxu0 %v489
        %v562 = vpop.f32.mrf.mxu0
        %v563 = vadd.f32 %v455, %v562
        %v564 = vpop.f32.mrf.mxu0
        %v565 = vadd.f32 %v455, %v564
        %566 = vmatmul.bf16.gmra.mxu0 %v490
        %v567 = vpop.f32.mrf.mxu0
        %v568 = vadd.f32 %v455, %v567
        %v569 = vpop.f32.mrf.mxu0
        %v570 = vadd.f32 %v455, %v569
        %571 = vmatmul.bf16.gmra.mxu0 %v491
        %v572 = vpop.f32.mrf.mxu0
        %v573 = vadd.f32 %v455, %v572
        %v574 = vpop.f32.mrf.mxu0
        %v575 = vadd.f32 %v455, %v574
        %576 = vmatmul.bf16.gmra.mxu0 %v492
        %v577 = vpop.f32.mrf.mxu0
        %v578 = vadd.f32 %v455, %v577
        %v579 = vpop.f32.mrf.mxu0
        %v580 = vadd.f32 %v455, %v579
        %581 = vmatmul.bf16.gmra.mxu0 %v493
        %v582 = vpop.f32.mrf.mxu0
        %v583 = vadd.f32 %v455, %v582
        %v584 = vpop.f32.mrf.mxu0
        %v585 = vadd.f32 %v455, %v584
        %586 = vmatmul.bf16.gmra.mxu0 %v494
        %v587 = vpop.f32.mrf.mxu0
        %v588 = vadd.f32 %v455, %v587
        %v589 = vpop.f32.mrf.mxu0
        %v590 = vadd.f32 %v455, %v589
        %591 = vmatmul.bf16.gmra.mxu0 %v495
        %v592 = vpop.f32.mrf.mxu0
        %v593 = vadd.f32 %v455, %v592
        %v594 = vpop.f32.mrf.mxu0
        %v595 = vadd.f32 %v455, %v594
        %596 = vmatmul.bf16.gmra.mxu0 %v496
        %v597 = vpop.f32.mrf.mxu0
        %v598 = vadd.f32 %v455, %v597
        %v599 = vpop.f32.mrf.mxu0
        %v600 = vadd.f32 %v455, %v599
        %601 = vdwg.mxu0
        %v602 = vtanh.pop %v563
        %v603 = vtanh.pop %v565
        %v604 = vtanh.pop %v568
        %v605 = vtanh.pop %v570
        %v606 = vtanh.pop %v573
        %v607 = vtanh.pop %v575
        %v608 = vtanh.pop %v578
        %v609 = vtanh.pop %v580
        %v610 = vtanh.pop %v583
        %v611 = vtanh.pop %v585
        %v612 = vtanh.pop %v588
        %v613 = vtanh.pop %v590
        %v614 = vtanh.pop %v593
        %v615 = vtanh.pop %v595
        %v616 = vtanh.pop %v598
        %v617 = vtanh.pop %v600
        %v618 = vpack.c.bf16 %v603, %v602
        %v619 = vpack.c.bf16 %v605, %v604
        %v620 = vpack.c.bf16 %v607, %v606
        %v621 = vpack.c.bf16 %v609, %v608
        %v622 = vpack.c.bf16 %v611, %v610
        %v623 = vpack.c.bf16 %v613, %v612
        %v624 = vpack.c.bf16 %v615, %v614
        %v625 = vpack.c.bf16 %v617, %v616
        %v626 = vld [vmem:[#allocation7] sm:$0xf]
        %v627 = vld [vmem:[#allocation7 + $0x4] sm:$0xf]
        %v628 = vld [vmem:[#allocation7 + $0x8] sm:$0xf]
        %v629 = vld [vmem:[#allocation7 + $0xc] sm:$0xf]
        %v630 = vld [vmem:[#allocation7 + $0x10] sm:$0xf]
        %v631 = vld [vmem:[#allocation7 + $0x14] sm:$0xf]
        %v632 = vld [vmem:[#allocation7 + $0x18] sm:$0xf]
        %v633 = vld [vmem:[#allocation7 + $0x1c] sm:$0xf]
        %v634 = vld [vmem:[#allocation7 + $0x20] sm:$0xf]
        %v635 = vld [vmem:[#allocation7 + $0x24] sm:$0xf]
        %v636 = vld [vmem:[#allocation7 + $0x28] sm:$0xf]
        %v637 = vld [vmem:[#allocation7 + $0x2c] sm:$0xf]
        %v638 = vld [vmem:[#allocation7 + $0x30] sm:$0xf]
        %v639 = vld [vmem:[#allocation7 + $0x34] sm:$0xf]
        %v640 = vld [vmem:[#allocation7 + $0x38] sm:$0xf]
        %v641 = vld [vmem:[#allocation7 + $0x3c] sm:$0xf]
        %v642 = vld [vmem:[%s4] sm:$0x1]
        %v644 = vperm.slane %v642, 0
        %v662 = vunpack.c.l.b16 %v626
        %v663 = vunpack.c.l.b16 %v627
        %v664 = vunpack.c.l.b16 %v628
        %v665 = vunpack.c.l.b16 %v629
        %v666 = vunpack.c.l.b16 %v630
        %v667 = vunpack.c.l.b16 %v631
        %v668 = vunpack.c.l.b16 %v632
        %v669 = vunpack.c.l.b16 %v633
        %v670 = vunpack.c.l.b16 %v634
        %v671 = vunpack.c.l.b16 %v635
        %v672 = vunpack.c.l.b16 %v636
        %v673 = vunpack.c.l.b16 %v637
        %v674 = vunpack.c.l.b16 %v638
        %v675 = vunpack.c.l.b16 %v639
        %v676 = vunpack.c.l.b16 %v640
        %v677 = vunpack.c.l.b16 %v641
        %v678 = vpack.c.b16 %v663, %v662
        %v679 = vpack.c.b16 %v665, %v664
        %v680 = vpack.c.b16 %v667, %v666
        %v681 = vpack.c.b16 %v669, %v668
        %v682 = vpack.c.b16 %v671, %v670
        %v683 = vpack.c.b16 %v673, %v672
        %v684 = vpack.c.b16 %v675, %v674
        %v685 = vpack.c.b16 %v677, %v676
        %694 = vmatpush.bf16.msra.mxu0 %v685
        %695 = vmatpush.bf16.msra.mxu0 %v684
        %696 = vmatpush.bf16.msra.mxu0 %v683
        %697 = vmatpush.bf16.msra.mxu0 %v682
        %698 = vmatpush.bf16.msra.mxu0 %v681
        %699 = vmatpush.bf16.msra.mxu0 %v680
        %700 = vmatpush.bf16.msra.mxu0 %v679
        %701 = vmatpush.bf16.msra.mxu0 %v678
        %702 = vmatmul.bf16.gmra.mxu0 %v618
        %v703 = vpop.f32.mrf.mxu0
        %v704 = vadd.f32 %v644, %v703
        %v705 = vpop.f32.mrf.mxu0
        %v706 = vadd.f32 %v644, %v705
        %707 = vmatmul.bf16.gmra.mxu0 %v619
        %v708 = vpop.f32.mrf.mxu0
        %v709 = vadd.f32 %v644, %v708
        %v710 = vpop.f32.mrf.mxu0
        %v711 = vadd.f32 %v644, %v710
        %712 = vmatmul.bf16.gmra.mxu0 %v620
        %v713 = vpop.f32.mrf.mxu0
        %v714 = vadd.f32 %v644, %v713
        %v715 = vpop.f32.mrf.mxu0
        %v716 = vadd.f32 %v644, %v715
        %717 = vmatmul.bf16.gmra.mxu0 %v621
        %v718 = vpop.f32.mrf.mxu0
        %v719 = vadd.f32 %v644, %v718
        %v720 = vpop.f32.mrf.mxu0
        %v721 = vadd.f32 %v644, %v720
        %722 = vmatmul.bf16.gmra.mxu0 %v622
        %v723 = vpop.f32.mrf.mxu0
        %v724 = vadd.f32 %v644, %v723
        %v725 = vpop.f32.mrf.mxu0
        %v726 = vadd.f32 %v644, %v725
        %727 = vmatmul.bf16.gmra.mxu0 %v623
        %v728 = vpop.f32.mrf.mxu0
        %v729 = vadd.f32 %v644, %v728
        %v730 = vpop.f32.mrf.mxu0
        %v731 = vadd.f32 %v644, %v730
        %732 = vmatmul.bf16.gmra.mxu0 %v624
        %v733 = vpop.f32.mrf.mxu0
        %v734 = vadd.f32 %v644, %v733
        %v735 = vpop.f32.mrf.mxu0
        %v736 = vadd.f32 %v644, %v735
        %737 = vmatmul.bf16.gmra.mxu0 %v625
        %v738 = vpop.f32.mrf.mxu0
        %v739 = vadd.f32 %v644, %v738
        %v740 = vpop.f32.mrf.mxu0
        %v741 = vadd.f32 %v644, %v740
        %742 = vdwg.mxu0
        %v743 = vtanh.pop %v704
        %v744 = vtanh.pop %v706
        %v745 = vtanh.pop %v709
        %v746 = vtanh.pop %v711
        %v747 = vtanh.pop %v714
        %v748 = vtanh.pop %v716
        %v749 = vtanh.pop %v719
        %v750 = vtanh.pop %v721
        %v751 = vtanh.pop %v724
        %v752 = vtanh.pop %v726
        %v753 = vtanh.pop %v729
        %v754 = vtanh.pop %v731
        %v755 = vtanh.pop %v734
        %v756 = vtanh.pop %v736
        %v757 = vtanh.pop %v739
        %v758 = vtanh.pop %v741
        %v759 = vpack.c.bf16 %v744, %v743
        %v760 = vpack.c.bf16 %v746, %v745
        %v761 = vpack.c.bf16 %v748, %v747
        %v762 = vpack.c.bf16 %v750, %v749
        %v763 = vpack.c.bf16 %v752, %v751
        %v764 = vpack.c.bf16 %v754, %v753
        %v765 = vpack.c.bf16 %v756, %v755
        %v766 = vpack.c.bf16 %v758, %v757
        %v767 = vld [vmem:[#allocation8] sm:$0xf]
        %v768 = vld [vmem:[#allocation8 + $0x4] sm:$0xf]
        %v769 = vld [vmem:[#allocation8 + $0x8] sm:$0xf]
        %v770 = vld [vmem:[#allocation8 + $0xc] sm:$0xf]
        %v771 = vld [vmem:[#allocation8 + $0x10] sm:$0xf]
        %v772 = vld [vmem:[#allocation8 + $0x14] sm:$0xf]
        %v773 = vld [vmem:[#allocation8 + $0x18] sm:$0xf]
        %v774 = vld [vmem:[#allocation8 + $0x1c] sm:$0xf]
        %v775 = vld [vmem:[#allocation8 + $0x20] sm:$0xf]
        %v776 = vld [vmem:[#allocation8 + $0x24] sm:$0xf]
        %v777 = vld [vmem:[#allocation8 + $0x28] sm:$0xf]
        %v778 = vld [vmem:[#allocation8 + $0x2c] sm:$0xf]
        %v779 = vld [vmem:[#allocation8 + $0x30] sm:$0xf]
        %v780 = vld [vmem:[#allocation8 + $0x34] sm:$0xf]
        %v781 = vld [vmem:[#allocation8 + $0x38] sm:$0xf]
        %v782 = vld [vmem:[#allocation8 + $0x3c] sm:$0xf]
        %v783 = vld [vmem:[%s6] sm:$0x1]
        %v785 = vperm.slane %v783, 0
        %v803 = vunpack.c.l.b16 %v767
        %v804 = vunpack.c.l.b16 %v768
        %v805 = vunpack.c.l.b16 %v769
        %v806 = vunpack.c.l.b16 %v770
        %v807 = vunpack.c.l.b16 %v771
        %v808 = vunpack.c.l.b16 %v772
        %v809 = vunpack.c.l.b16 %v773
        %v810 = vunpack.c.l.b16 %v774
        %v811 = vunpack.c.l.b16 %v775
        %v812 = vunpack.c.l.b16 %v776
        %v813 = vunpack.c.l.b16 %v777
        %v814 = vunpack.c.l.b16 %v778
        %v815 = vunpack.c.l.b16 %v779
        %v816 = vunpack.c.l.b16 %v780
        %v817 = vunpack.c.l.b16 %v781
        %v818 = vunpack.c.l.b16 %v782
        %v819 = vpack.c.b16 %v804, %v803
        %v820 = vpack.c.b16 %v806, %v805
        %v821 = vpack.c.b16 %v808, %v807
        %v822 = vpack.c.b16 %v810, %v809
        %v823 = vpack.c.b16 %v812, %v811
        %v824 = vpack.c.b16 %v814, %v813
        %v825 = vpack.c.b16 %v816, %v815
        %v826 = vpack.c.b16 %v818, %v817
        %835 = vmatpush.bf16.msra.mxu0 %v826
        %836 = vmatpush.bf16.msra.mxu0 %v825
        %837 = vmatpush.bf16.msra.mxu0 %v824
        %838 = vmatpush.bf16.msra.mxu0 %v823
        %839 = vmatpush.bf16.msra.mxu0 %v822
        %840 = vmatpush.bf16.msra.mxu0 %v821
        %841 = vmatpush.bf16.msra.mxu0 %v820
        %842 = vmatpush.bf16.msra.mxu0 %v819
        %843 = vmatmul.bf16.gmra.mxu0 %v759
        %v844 = vpop.f32.mrf.mxu0
        %v845 = vadd.f32 %v785, %v844
        %v846 = vpop.f32.mrf.mxu0
        %v847 = vadd.f32 %v785, %v846
        %848 = vmatmul.bf16.gmra.mxu0 %v760
        %v849 = vpop.f32.mrf.mxu0
        %v850 = vadd.f32 %v785, %v849
        %v851 = vpop.f32.mrf.mxu0
        %v852 = vadd.f32 %v785, %v851
        %853 = vmatmul.bf16.gmra.mxu0 %v761
        %v854 = vpop.f32.mrf.mxu0
        %v855 = vadd.f32 %v785, %v854
        %v856 = vpop.f32.mrf.mxu0
        %v857 = vadd.f32 %v785, %v856
        %858 = vmatmul.bf16.gmra.mxu0 %v762
        %v859 = vpop.f32.mrf.mxu0
        %v860 = vadd.f32 %v785, %v859
        %v861 = vpop.f32.mrf.mxu0
        %v862 = vadd.f32 %v785, %v861
        %863 = vmatmul.bf16.gmra.mxu0 %v763
        %v864 = vpop.f32.mrf.mxu0
        %v865 = vadd.f32 %v785, %v864
        %v866 = vpop.f32.mrf.mxu0
        %v867 = vadd.f32 %v785, %v866
        %868 = vmatmul.bf16.gmra.mxu0 %v764
        %v869 = vpop.f32.mrf.mxu0
        %v870 = vadd.f32 %v785, %v869
        %v871 = vpop.f32.mrf.mxu0
        %v872 = vadd.f32 %v785, %v871
        %873 = vmatmul.bf16.gmra.mxu0 %v765
        %v874 = vpop.f32.mrf.mxu0
        %v875 = vadd.f32 %v785, %v874
        %v876 = vpop.f32.mrf.mxu0
        %v877 = vadd.f32 %v785, %v876
        %878 = vmatmul.bf16.gmra.mxu0 %v766
        %v879 = vpop.f32.mrf.mxu0
        %v880 = vadd.f32 %v785, %v879
        %v881 = vpop.f32.mrf.mxu0
        %v882 = vadd.f32 %v785, %v881
        %883 = vdwg.mxu0
        %v884 = vtanh.pop %v845
        %v885 = vtanh.pop %v847
        %v886 = vtanh.pop %v850
        %v887 = vtanh.pop %v852
        %v888 = vtanh.pop %v855
        %v889 = vtanh.pop %v857
        %v890 = vtanh.pop %v860
        %v891 = vtanh.pop %v862
        %v892 = vtanh.pop %v865
        %v893 = vtanh.pop %v867
        %v894 = vtanh.pop %v870
        %v895 = vtanh.pop %v872
        %v896 = vtanh.pop %v875
        %v897 = vtanh.pop %v877
        %v898 = vtanh.pop %v880
        %v899 = vtanh.pop %v882
        %v900 = vpack.c.bf16 %v885, %v884
        %v901 = vpack.c.bf16 %v887, %v886
        %v902 = vpack.c.bf16 %v889, %v888
        %v903 = vpack.c.bf16 %v891, %v890
        %v904 = vpack.c.bf16 %v893, %v892
        %v905 = vpack.c.bf16 %v895, %v894
        %v906 = vpack.c.bf16 %v897, %v896
        %v907 = vpack.c.bf16 %v899, %v898
        %v908 = vld [vmem:[#allocation10] sm:$0xf]
        %v909 = vld [vmem:[#allocation10 + $0x4] sm:$0xf]
        %v910 = vld [vmem:[#allocation10 + $0x8] sm:$0xf]
        %v911 = vld [vmem:[#allocation10 + $0xc] sm:$0xf]
        %v912 = vld [vmem:[#allocation10 + $0x10] sm:$0xf]
        %v913 = vld [vmem:[#allocation10 + $0x14] sm:$0xf]
        %v914 = vld [vmem:[#allocation10 + $0x18] sm:$0xf]
        %v915 = vld [vmem:[#allocation10 + $0x1c] sm:$0xf]
        %v916 = vld [vmem:[#allocation10 + $0x20] sm:$0xf]
        %v917 = vld [vmem:[#allocation10 + $0x24] sm:$0xf]
        %v918 = vld [vmem:[#allocation10 + $0x28] sm:$0xf]
        %v919 = vld [vmem:[#allocation10 + $0x2c] sm:$0xf]
        %v920 = vld [vmem:[#allocation10 + $0x30] sm:$0xf]
        %v921 = vld [vmem:[#allocation10 + $0x34] sm:$0xf]
        %v922 = vld [vmem:[#allocation10 + $0x38] sm:$0xf]
        %v923 = vld [vmem:[#allocation10 + $0x3c] sm:$0xf]
        %v924 = vld [vmem:[%s8] sm:$0x1]
        %v926 = vperm.slane %v924, 0
        %v944 = vunpack.c.l.b16 %v908
        %v945 = vunpack.c.l.b16 %v909
        %v946 = vunpack.c.l.b16 %v910
        %v947 = vunpack.c.l.b16 %v911
        %v948 = vunpack.c.l.b16 %v912
        %v949 = vunpack.c.l.b16 %v913
        %v950 = vunpack.c.l.b16 %v914
        %v951 = vunpack.c.l.b16 %v915
        %v952 = vunpack.c.l.b16 %v916
        %v953 = vunpack.c.l.b16 %v917
        %v954 = vunpack.c.l.b16 %v918
        %v955 = vunpack.c.l.b16 %v919
        %v956 = vunpack.c.l.b16 %v920
        %v957 = vunpack.c.l.b16 %v921
        %v958 = vunpack.c.l.b16 %v922
        %v959 = vunpack.c.l.b16 %v923
        %v960 = vpack.c.b16 %v945, %v944
        %v961 = vpack.c.b16 %v947, %v946
        %v962 = vpack.c.b16 %v949, %v948
        %v963 = vpack.c.b16 %v951, %v950
        %v964 = vpack.c.b16 %v953, %v952
        %v965 = vpack.c.b16 %v955, %v954
        %v966 = vpack.c.b16 %v957, %v956
        %v967 = vpack.c.b16 %v959, %v958
        %976 = vmatpush.bf16.msra.mxu0 %v967
        %977 = vmatpush.bf16.msra.mxu0 %v966
        %978 = vmatpush.bf16.msra.mxu0 %v965
        %979 = vmatpush.bf16.msra.mxu0 %v964
        %980 = vmatpush.bf16.msra.mxu0 %v963
        %981 = vmatpush.bf16.msra.mxu0 %v962
        %982 = vmatpush.bf16.msra.mxu0 %v961
        %983 = vmatpush.bf16.msra.mxu0 %v960
        %984 = vmatmul.bf16.gmra.mxu0 %v900
        %v985 = vpop.f32.mrf.mxu0
        %v986 = vadd.f32 %v926, %v985
        %v987 = vpop.f32.mrf.mxu0
        %v988 = vadd.f32 %v926, %v987
        %989 = vmatmul.bf16.gmra.mxu0 %v901
        %v990 = vpop.f32.mrf.mxu0
        %v991 = vadd.f32 %v926, %v990
        %v992 = vpop.f32.mrf.mxu0
        %v993 = vadd.f32 %v926, %v992
        %994 = vmatmul.bf16.gmra.mxu0 %v902
        %v995 = vpop.f32.mrf.mxu0
        %v996 = vadd.f32 %v926, %v995
        %v997 = vpop.f32.mrf.mxu0
        %v998 = vadd.f32 %v926, %v997
        %999 = vmatmul.bf16.gmra.mxu0 %v903
        %v1000 = vpop.f32.mrf.mxu0
        %v1001 = vadd.f32 %v926, %v1000
        %v1002 = vpop.f32.mrf.mxu0
        %v1003 = vadd.f32 %v926, %v1002
        %1004 = vmatmul.bf16.gmra.mxu0 %v904
        %v1005 = vpop.f32.mrf.mxu0
        %v1006 = vadd.f32 %v926, %v1005
        %v1007 = vpop.f32.mrf.mxu0
        %v1008 = vadd.f32 %v926, %v1007
        %1009 = vmatmul.bf16.gmra.mxu0 %v905
        %v1010 = vpop.f32.mrf.mxu0
        %v1011 = vadd.f32 %v926, %v1010
        %v1012 = vpop.f32.mrf.mxu0
        %v1013 = vadd.f32 %v926, %v1012
        %1014 = vmatmul.bf16.gmra.mxu0 %v906
        %v1015 = vpop.f32.mrf.mxu0
        %v1016 = vadd.f32 %v926, %v1015
        %v1017 = vpop.f32.mrf.mxu0
        %v1018 = vadd.f32 %v926, %v1017
        %1019 = vmatmul.bf16.gmra.mxu0 %v907
        %v1020 = vpop.f32.mrf.mxu0
        %v1021 = vadd.f32 %v926, %v1020
        %v1022 = vpop.f32.mrf.mxu0
        %v1023 = vadd.f32 %v926, %v1022
        %1024 = vdwg.mxu0
        %1025 = vst [vmem:[%s418] sm:$0xff] %v986
        %1026 = vst [vmem:[%s418 + $0x8] sm:$0xff] %v988
        %1027 = vst [vmem:[%s418 + $0x10] sm:$0xff] %v991
        %1028 = vst [vmem:[%s418 + $0x18] sm:$0xff] %v993
        %1029 = vst [vmem:[%s418 + $0x20] sm:$0xff] %v996
        %1030 = vst [vmem:[%s418 + $0x28] sm:$0xff] %v998
        %1031 = vst [vmem:[%s418 + $0x30] sm:$0xff] %v1001
        %1032 = vst [vmem:[%s418 + $0x38] sm:$0xff] %v1003
        %1033 = vst [vmem:[%s418 + $0x40] sm:$0xff] %v1006
        %1034 = vst [vmem:[%s418 + $0x48] sm:$0xff] %v1008
        %1035 = vst [vmem:[%s418 + $0x50] sm:$0xff] %v1011
        %1036 = vst [vmem:[%s418 + $0x58] sm:$0xff] %v1013
        %1037 = vst [vmem:[%s418 + $0x60] sm:$0xff] %v1016
        %1038 = vst [vmem:[%s418 + $0x68] sm:$0xff] %v1018
        %1039 = vst [vmem:[%s418 + $0x70] sm:$0xff] %v1021
        %1040 = vst [vmem:[%s418 + $0x78] sm:$0xff] %v1023
        %s1041 = sand.u32 %s230, 1
        %s1042 = scalar_lea.sflag [#allocation4], %s1041
        %s1043 = sand.u32 %s230, 1
        %s1044 = smul.addr %s1043, 128
        %s1045 = scalar_lea.vmem [#allocation11], %s1044
        // Predicated region
        $region77: #{tpu_custom_call.1} parent=55 // pred_check
          %p1046 = pneg %p240
        $region78: #{tpu_custom_call.1} parent=55 // pred_check_branch
          %1048 = sbr.rel (%p1046) target = $region80
        $region79: #{tpu_custom_call.1} parent=55 // pred_region
          %s1049 = smul.u32 16, %s28
          %1051 = vsyncadd %s1042, 0
          %s1052 = smul.addr %s1049, 8
          %s1053 = scalar_lea.hbm %s9, %s1052
          %s1054 = sshll.u32 %s1045, 4
          %s1055 = int_to_ptr.vmem [resolvable:$true] %s1054
          %s1056 = sshll.u32 %s1053, 4
          %s1057 = int_to_ptr.hbm [resolvable:$true] %s1056
          %1062 = dma.vmem_to_hbm [thread:$0]  %s1055, 2048, %s1057, %s1042, 128, 128, 8
        $region80: #{tpu_custom_call.1} parent=55 // pred_fallthru
          _
      $region56: #{tpu_custom_call.1} parent=5 // pred_fallthru
        _
      %p1063 = scmp.le.s32.totalorder 2, %s23
      // Predicated region
      $region81: #{tpu_custom_call.1} parent=5 // pred_check
        %p1064 = pneg %p1063
      $region82: #{tpu_custom_call.1} parent=5 // pred_check_branch
        %1066 = sbr.rel (%p1064) target = $region84
      $region83: #{tpu_custom_call.1} parent=5 // pred_region
        %s1067 = ssub.s32 %s23, 2
        // Predicated region
        $region85: #{tpu_custom_call.1} parent=83 // pred_check
          %p1068 = pneg %p246
        $region86: #{tpu_custom_call.1} parent=83 // pred_check_branch
          %1070 = sbr.rel (%p1068) target = $region88
        $region87: #{tpu_custom_call.1} parent=83 // pred_region
          %s1071 = sand.u32 %s231, 1
          %s1072 = scalar_lea.sflag [#allocation4], %s1071
          %s1073 = sand.u32 %s231, 1
          %s1074 = smul.addr %s1073, 128
          %s1075 = scalar_lea.vmem [#allocation11], %s1074
          %1077 = dma.done %s1072, 2048
        $region88: #{tpu_custom_call.1} parent=83 // pred_fallthru
          _
      $region84: #{tpu_custom_call.1} parent=5 // pred_fallthru
        _
    $region6: #{tpu_custom_call.1} parent=1 // loop_footer
      %s27 = sadd.s32 1, %s23
    $region7: #{tpu_custom_call.1} parent=1 // loop_footer_branch
      %22 = sbr.rel target = $region3
    $region8: #{tpu_custom_call.1} parent=1 // loop_exit
      _
    %1078 = vsyncpa [#allocation3], 1
    %s1079 = scalar_lea.sflag [#allocation3], 1
    %1080 = vsyncpa %s1079, 1
    %1081 = vsyncpa [#allocation6], 1
    %1082 = vsyncpa [#allocation9], 1
    %1083 = vsyncpa [#allocation4], 1
    %s1084 = scalar_lea.sflag [#allocation4], 1
    %1085 = vsyncpa %s1084, 1

</llo_original>
